<compile_context>
chip_gen: v7x
topology: tpu7x:2x2x1
jax: 0.10.0
libtpu: 0.0.40
codegen_flags: <defaults>
</compile_context>

<pallas_src>
import functools
import math

import jax
import jax.numpy as jnp
from jax import lax
from jax.experimental import pallas as pl
from jax.experimental.pallas import tpu as pltpu


ROI_TILE = 32     # ROIs per grid step (sweep 32-128 for realistic proposal counts)


# -----------------------------------------------------------------------------
# Fused Head + Output tower kernel.
#   x_ref  : (NT, R+2, R*Cin)   ROI features, rows=(roi, y) with y halo,
#                               lanes=(x, cin); compute dtype
#   w1_ref : (3, R*Cin, R*Ch)   banded conv1 weights (one matrix per dy tap)
#   w2_ref : (3, R*Ch,  R*Ch)   banded conv2 weights
#   wo_ref : (3, R*Ch,  R*COp)  banded fused cls|reg|ctr weights
#   b_ref  : (8, max(LCH,LCO))  packed biases, tiled over x (f32)
#   o_ref  : (NT*R, R*COp)      lane-dense output slab
#   pad_ref: VMEM (NT, R+2, R*Ch) y-halo activation scratch (compute dtype)
# -----------------------------------------------------------------------------
def _hier_tower_kernel(x_ref, w1_ref, w2_ref, wo_ref, b_ref, o_ref, pad_ref,
                       *, NT, R, LCI, LCH, LCO):
    f32 = jnp.float32
    MR = NT * R

    # Keep the per-ROI y-halo rows of the activation scratch at zero.  Only
    # these two row planes are touched; the interior is fully overwritten
    # below, so this is the only zeroing needed.  (A one-time program_id==0
    # init would be wrong under megacore: each TensorCore has its own scratch
    # but only one core runs step 0.)
    zrow = jnp.zeros((NT, 1, LCH), pad_ref.dtype)
    pad_ref[:, 0:1, :] = zrow
    pad_ref[:, R + 1:R + 2, :] = zrow

    def conv3(src_ref, w_ref, lin, lout):
        # Row-layout 3x3 SAME conv: rows=(roi, y), lanes=(x, c).  The dx taps
        # and the x zero-padding live inside the block-banded weight, so each
        # dy tap is one plain matmul and no im2col / relayout is needed.
        acc = jnp.zeros((MR, lout), f32)
        for dy in range(3):                                      # unrolled
            slab = src_ref[:, dy:dy + R, :].reshape(MR, lin)
            acc = acc + jnp.dot(slab, w_ref[dy],
                                preferred_element_type=f32)
        return acc

    h = conv3(x_ref, w1_ref, LCI, LCH)                  # Head conv1
    h = jnp.maximum(h + b_ref[0:1, :LCH], 0.0)          # bias + ReLU in f32
    pad_ref[:, 1:R + 1, :] = h.reshape(NT, R, LCH).astype(pad_ref.dtype)

    h = conv3(pad_ref, w2_ref, LCH, LCH)                # Head conv2
    h = jnp.maximum(h + b_ref[1:2, :LCH], 0.0)
    pad_ref[:, 1:R + 1, :] = h.reshape(NT, R, LCH).astype(pad_ref.dtype)

    out = conv3(pad_ref, wo_ref, LCH, LCO)              # fused cls|reg|ctr
    out = out + b_ref[2:3, :LCO]
    o_ref[...] = out.astype(o_ref.dtype)


def _banded_weights(w_hwio, R, out_stride, dtype):
    """(3,3,Cin,Cout) HWIO conv weights -> (3, R*Cin, R*out_stride) banded mats.

    band[dy, xi*Cin+ci, xo*out_stride+co] = w[dy, xi-xo+1, ci, co] (else 0), so
    one matmul with a (rows, R*Cin) row-slab applies all dx taps of a dy tap,
    including the SAME x zero-padding.  out_stride >= Cout pads the per-pixel
    output channel block (used to make the fused head lane-dense).
    """
    _, _, cin, cout = w_hwio.shape
    dx = jnp.arange(3)[:, None, None]
    xi = jnp.arange(R)[None, :, None]
    xo = jnp.arange(R)[None, None, :]
    sel = (xi == xo + dx - 1).astype(jnp.float32)                 # (3, R, R)
    band = jnp.einsum("dzio,zab->daibo", w_hwio.astype(jnp.float32), sel)
    band = jnp.pad(band, ((0, 0),) * 4 + ((0, out_stride - cout),))
    return band.reshape(3, R * cin, R * out_stride).astype(dtype)


def hier_tower_pallas(x_roi, params, *, roi_tile=ROI_TILE,
                      compute_dtype=jnp.bfloat16):
    """Fused Head (2x conv3x3+ReLU) + Output (cls/reg/ctr conv3x3) tower."""
    N, R, R2, Cin = x_roi.shape
    assert R == R2
    Ch = params["head_w1"].shape[-1]
    nc = params["cls_w"].shape[-1]
    nr = params["reg_w"].shape[-1]
    nt = params["ctr_w"].shape[-1]
    n_out = nc + nr + nt

    LCI = R * Cin
    LCH = R * Ch
    assert LCH % 128 == 0, "kernel assumes R*hidden is a multiple of 128 lanes"
    co_unit = 128 // math.gcd(R, 128)
    co_pad = -(-n_out // co_unit) * co_unit       # smallest lane-dense padding
    LCO = R * co_pad
    LB = max(LCH, LCO)

    # ROI tiling: big enough to amortize per-step pipeline overhead, but keep
    # >= 2 grid steps so a v7x megacore can shard the parallel ROI axis.
    NT = max(1, min(roi_tile, N))
    if N > 1:
        NT = min(NT, -(-N // 2))
    n_pad = -(-N // NT) * NT
    MR = NT * R

    # ROI features: rows=(roi, y) with pre-padded y halo, lanes=(x, cin).
    x_rows = x_roi.reshape(N, R, LCI)
    x_rows = jnp.pad(x_rows, ((0, n_pad - N), (1, 1), (0, 0)))
    x_rows = x_rows.astype(compute_dtype)

    # Block-banded weights (dx taps + x-padding folded in); bf16 by default.
    w1b = _banded_weights(params["head_w1"], R, Ch, compute_dtype)
    w2b = _banded_weights(params["head_w2"], R, Ch, compute_dtype)
    wo_hwio = jnp.concatenate(
        [params["cls_w"], params["reg_w"], params["ctr_w"]], axis=-1)
    wob = _banded_weights(wo_hwio, R, co_pad, compute_dtype)

    # Packed biases, tiled over x (lanes are (x, c)); kept in f32.
    bias = jnp.zeros((8, LB), jnp.float32)
    bias = bias.at[0, :LCH].set(jnp.tile(params["head_b1"], R))
    bias = bias.at[1, :LCH].set(jnp.tile(params["head_b2"], R))
    bo = jnp.concatenate([params["cls_b"], params["reg_b"], params["ctr_b"]])
    bias = bias.at[2, :LCO].set(jnp.tile(jnp.pad(bo, (0, co_pad - n_out)), R))

    grid = (n_pad // NT,)
    kernel = functools.partial(_hier_tower_kernel, NT=NT, R=R,
                               LCI=LCI, LCH=LCH, LCO=LCO)

    itemsize = jnp.dtype(compute_dtype).itemsize
    flops = 2 * grid[0] * 3 * MR * (LCI * LCH + LCH * LCH + LCH * LCO)
    bytes_accessed = (x_rows.size * itemsize
                      + (w1b.size + w2b.size + wob.size) * itemsize
                      + bias.size * 4
                      + n_pad * R * LCO * itemsize)

    out = pl.pallas_call(
        kernel,
        out_shape=jax.ShapeDtypeStruct((n_pad * R, LCO), compute_dtype),
        grid=grid,
        in_specs=[
            pl.BlockSpec((NT, R + 2, LCI), lambda i: (i, 0, 0)),
            pl.BlockSpec((3, LCI, LCH), lambda i: (0, 0, 0)),
            pl.BlockSpec((3, LCH, LCH), lambda i: (0, 0, 0)),
            pl.BlockSpec((3, LCH, LCO), lambda i: (0, 0, 0)),
            pl.BlockSpec((8, LB), lambda i: (0, 0)),
        ],
        out_specs=pl.BlockSpec((MR, LCO), lambda i: (i, 0)),
        scratch_shapes=[pltpu.VMEM((NT, R + 2, LCH), compute_dtype)],
        compiler_params=pltpu.CompilerParams(
            dimension_semantics=("parallel",)),
        cost_estimate=pl.CostEstimate(flops=int(flops), transcendentals=0,
                                      bytes_accessed=int(bytes_accessed)),
    )(x_rows, w1b, w2b, wob, bias)

    # Drop padded-ROI rows (harmless relu(bias) garbage), unpack (x, co) lanes.
    out = out[:N * R, :].reshape(N, R, R, co_pad).astype(jnp.float32)
    return (out[..., :nc],
            out[..., nc:nc + nr],
            out[..., nc + nr:nc + nr + nt])


# -----------------------------------------------------------------------------
# ROIAlign (bilinear, one sample per bin) — JAX glue (data-dependent gather).
#   feat_nhwc: (B, H, W, C), boxes: (N_roi, 4) image coords, batch_idx: (N_roi,)
# One combined gather per ROI for the four bilinear corners.
# -----------------------------------------------------------------------------
def roi_align_bilinear(feat_nhwc, boxes, batch_idx, spatial_scale, R):
    B, H, W, C = feat_nhwc.shape
    flat = feat_nhwc.reshape(B * H * W, C)

    def one(box, bi):
        bx1, by1, bx2, by2 = box * spatial_scale
        ys = by1 + (jnp.arange(R, dtype=jnp.float32) + 0.5) * (by2 - by1) / R
        xs = bx1 + (jnp.arange(R, dtype=jnp.float32) + 0.5) * (bx2 - bx1) / R
        y = jnp.clip(ys, 0.0, H - 1.0)
        x = jnp.clip(xs, 0.0, W - 1.0)
        y0 = jnp.floor(y)
        x0 = jnp.floor(x)
        y0i = y0.astype(jnp.int32)
        x0i = x0.astype(jnp.int32)
        y1i = jnp.minimum(y0i + 1, H - 1)
        x1i = jnp.minimum(x0i + 1, W - 1)
        wy = (y - y0)[:, None]
        wx = (x - x0)[None, :]
        idx = jnp.stack([y0i[:, None] * W + x0i[None, :],
                         y0i[:, None] * W + x1i[None, :],
                         y1i[:, None] * W + x0i[None, :],
                         y1i[:, None] * W + x1i[None, :]], 0)      # (4, R, R)
        g = jnp.take(flat, bi * (H * W) + idx.reshape(-1), axis=0)
        g = g.reshape(4, R, R, C)
        wts = jnp.stack([(1 - wy) * (1 - wx), (1 - wy) * wx,
                         wy * (1 - wx), wy * wx], 0)               # (4, R, R)
        return jnp.sum(g * wts[..., None], axis=0)

    return jax.vmap(one)(boxes, batch_idx)


# -----------------------------------------------------------------------------
# HierRCNN (inference path): Head + Output.
# -----------------------------------------------------------------------------
def hier_rcnn_forward(conv_features_nchw, boxes, batch_idx, params,
                      spatial_scale, roi_res, compute_dtype=jnp.bfloat16):
    feat_nhwc = jnp.transpose(conv_features_nchw, (0, 2, 3, 1))
    x = roi_align_bilinear(feat_nhwc, boxes, batch_idx, spatial_scale, roi_res)
    return hier_tower_pallas(x, params, compute_dtype=compute_dtype)


# -----------------------------------------------------------------------------
# Pure-JAX reference for the conv tower (correctness check).
# -----------------------------------------------------------------------------
def conv3x3_ref(x, w, b, relu=False):
    y = lax.conv_general_dilated(
        x, w, window_strides=(1, 1), padding="SAME",
        dimension_numbers=("NHWC", "HWIO", "NHWC"))
    y = y + b.reshape(1, 1, 1, -1)
    if relu:
        y = jnp.maximum(y, 0.0)
    return y


if __name__ == "__main__":
    key = jax.random.PRNGKey(0)

    # Small shapes consistent with the module's forward.
    B, dim_in, H, W = 2, 4, 16, 16          # conv_features: (B, C, H, W) NCHW
    img_size = 64.0
    spatial_scale = H / img_size            # feature stride 4 -> scale 0.25
    num_rois = 8
    roi_res = 8                             # ROIAlign output resolution
    hidden = 32
    num_classes = 8

    ks = jax.random.split(key, 16)
    conv_features = jax.random.normal(ks[0], (B, dim_in, H, W), jnp.float32)

    # Proposals: boxes (x1,y1,x2,y2) in image coordinates + batch indices.
    cx = jax.random.uniform(ks[1], (num_rois,), minval=16.0, maxval=48.0)
    cy = jax.random.uniform(ks[2], (num_rois,), minval=16.0, maxval=48.0)
    bw = jax.random.uniform(ks[3], (num_rois,), minval=8.0, maxval=32.0)
    bh = jax.random.uniform(ks[4], (num_rois,), minval=8.0, maxval=32.0)
    boxes = jnp.clip(
        jnp.stack([cx - bw / 2, cy - bh / 2, cx + bw / 2, cy + bh / 2], -1),
        0.0, img_size - 1.0)
    batch_idx = jnp.arange(num_rois, dtype=jnp.int32) % B

    def init_conv(k, cin, cout):
        return 0.02 * jax.random.normal(k, (3, 3, cin, cout), jnp.float32)

    params = {
        "head_w1": init_conv(ks[5], dim_in, hidden),
        "head_b1": 0.01 * jax.random.normal(ks[10], (hidden,), jnp.float32),
        "head_w2": init_conv(ks[6], hidden, hidden),
        "head_b2": 0.01 * jax.random.normal(ks[11], (hidden,), jnp.float32),
        "cls_w": init_conv(ks[7], hidden, num_classes),
        "cls_b": 0.01 * jax.random.normal(ks[12], (num_classes,), jnp.float32),
        "reg_w": init_conv(ks[8], hidden, 4),
        "reg_b": 0.01 * jax.random.normal(ks[13], (4,), jnp.float32),
        "ctr_w": init_conv(ks[9], hidden, 1),
        "ctr_b": 0.01 * jax.random.normal(ks[14], (1,), jnp.float32),
    }

    # Default (bf16 matmul) path.
    fwd = jax.jit(functools.partial(
        hier_rcnn_forward, spatial_scale=spatial_scale, roi_res=roi_res))
    box_cls, box_reg, centerness = fwd(conv_features, boxes, batch_idx, params)
    jax.block_until_ready((box_cls, box_reg, centerness))

    assert box_cls.shape == (num_rois, roi_res, roi_res, num_classes)
    assert box_reg.shape == (num_rois, roi_res, roi_res, 4)
    assert centerness.shape == (num_rois, roi_res, roi_res, 1)

    # Pure-JAX reference for the conv tower.
    feat_nhwc = jnp.transpose(conv_features, (0, 2, 3, 1))
    x_roi = roi_align_bilinear(feat_nhwc, boxes, batch_idx, spatial_scale,
                               roi_res)
    h_ref = conv3x3_ref(x_roi, params["head_w1"], params["head_b1"], relu=True)
    h_ref = conv3x3_ref(h_ref, params["head_w2"], params["head_b2"], relu=True)
    cls_ref = conv3x3_ref(h_ref, params["cls_w"], params["cls_b"])
    reg_ref = conv3x3_ref(h_ref, params["reg_w"], params["reg_b"])
    ctr_ref = conv3x3_ref(h_ref, params["ctr_w"], params["ctr_b"])

    # Tight check: f32 compute path of the same fused kernel.
    cls32, reg32, ctr32 = jax.jit(functools.partial(
        hier_tower_pallas, compute_dtype=jnp.float32))(x_roi, params)
    assert jnp.allclose(cls32, cls_ref, atol=1e-4, rtol=1e-3)
    assert jnp.allclose(reg32, reg_ref, atol=1e-4, rtol=1e-3)
    assert jnp.allclose(ctr32, ctr_ref, atol=1e-4, rtol=1e-3)

    # Loose check: default bf16-matmul path (f32 accumulation).
    assert jnp.allclose(box_cls, cls_ref, atol=5e-3, rtol=5e-2)
    assert jnp.allclose(box_reg, reg_ref, atol=5e-3, rtol=5e-2)
    assert jnp.allclose(centerness, ctr_ref, atol=5e-3, rtol=5e-2)

    print("KERNEL_OK")
</pallas_src>

<mosaic_0001>
module attributes {stable_mosaic.version = 11 : i64} {
  func.func @_hier_tower_kernel(%arg0: i32, %arg1: memref<4x10x32xbf16, #tpu.memory_space<vmem>>, %arg2: memref<3x32x256xbf16, #tpu.memory_space<vmem>>, %arg3: memref<3x256x256xbf16, #tpu.memory_space<vmem>>, %arg4: memref<3x256x128xbf16, #tpu.memory_space<vmem>>, %arg5: memref<8x256xf32, #tpu.memory_space<vmem>>, %arg6: memref<32x128xbf16, #tpu.memory_space<vmem>>, %arg7: memref<4x10x256xbf16, #tpu.memory_space<vmem>>) attributes {dimension_semantics = [#tpu.dimension_semantics<parallel>], iteration_bounds = array<i64: 2>, scalar_prefetch = 0 : i64, scratch_operands = 1 : i64, tpu.core_type = #tpu.core_type<tc>, window_params = [{transform_indices = @transform_0, window_bounds = array<i64: 4, 10, 32>}, {pipeline_mode = #tpu.pipeline_mode<synchronous>, transform_indices = @transform_1, window_bounds = array<i64: 3, 32, 256>}, {pipeline_mode = #tpu.pipeline_mode<synchronous>, transform_indices = @transform_2, window_bounds = array<i64: 3, 256, 256>}, {pipeline_mode = #tpu.pipeline_mode<synchronous>, transform_indices = @transform_3, window_bounds = array<i64: 3, 256, 128>}, {pipeline_mode = #tpu.pipeline_mode<synchronous>, transform_indices = @transform_4, window_bounds = array<i64: 8, 256>}, {transform_indices = @transform_5, window_bounds = array<i64: 32, 128>}]} {
    %cst = arith.constant 0.000000e+00 : bf16
    %0 = vector.broadcast %cst : bf16 to vector<4x1x256xbf16>
    %c0 = arith.constant 0 : index
    %c0_0 = arith.constant 0 : index
    %c0_1 = arith.constant 0 : index
    %1 = vector.load %arg7[%c0, %c0_0, %c0_1] : memref<4x10x256xbf16, #tpu.memory_space<vmem>>, vector<4x1x256xbf16>
    tpu.vector_store %arg7[%c0, %c0_0, %c0_1], %0 {strides = array<i32>} : memref<4x10x256xbf16, #tpu.memory_space<vmem>>, vector<4x1x256xbf16>,
    %c0_2 = arith.constant 0 : index
    %c9 = arith.constant 9 : index
    %c0_3 = arith.constant 0 : index
    %2 = vector.load %arg7[%c0_2, %c9, %c0_3] : memref<4x10x256xbf16, #tpu.memory_space<vmem>>, vector<4x1x256xbf16>
    tpu.vector_store %arg7[%c0_2, %c9, %c0_3], %0 {strides = array<i32>} : memref<4x10x256xbf16, #tpu.memory_space<vmem>>, vector<4x1x256xbf16>,
    %cst_4 = arith.constant 0.000000e+00 : f32
    %3 = vector.broadcast %cst_4 : f32 to vector<32x256xf32>
    %c0_5 = arith.constant 0 : index
    %c0_6 = arith.constant 0 : index
    %c0_7 = arith.constant 0 : index
    %4 = vector.load %arg1[%c0_5, %c0_6, %c0_7] : memref<4x10x32xbf16, #tpu.memory_space<vmem>>, vector<4x8x32xbf16>
    %5 = vector.shape_cast %4 : vector<4x8x32xbf16> to vector<32x32xbf16>
    %c0_8 = arith.constant 0 : index
    %c0_9 = arith.constant 0 : index
    %c0_10 = arith.constant 0 : index
    %6 = vector.load %arg2[%c0_8, %c0_9, %c0_10] : memref<3x32x256xbf16, #tpu.memory_space<vmem>>, vector<1x32x256xbf16>
    %7 = vector.shape_cast %6 : vector<1x32x256xbf16> to vector<32x256xbf16>
    %cst_11 = arith.constant dense<0.000000e+00> : vector<32x256xf32>
    %8 = tpu.matmul %5, %7, %cst_11 {dimension_numbers = #tpu.dot_dimension_numbers<[1], [0], [0], [1], [0, 0, 1, 1], [], []>} : vector<32x32xbf16>, vector<32x256xbf16>, vector<32x256xf32> -> vector<32x256xf32>
    %9 = arith.addf %3, %8 : vector<32x256xf32>
    %c0_12 = arith.constant 0 : index
    %c1 = arith.constant 1 : index
    %c0_13 = arith.constant 0 : index
    %10 = vector.load %arg1[%c0_12, %c1, %c0_13] : memref<4x10x32xbf16, #tpu.memory_space<vmem>>, vector<4x8x32xbf16>
    %11 = vector.shape_cast %10 : vector<4x8x32xbf16> to vector<32x32xbf16>
    %c1_14 = arith.constant 1 : index
    %c0_15 = arith.constant 0 : index
    %c0_16 = arith.constant 0 : index
    %12 = vector.load %arg2[%c1_14, %c0_15, %c0_16] : memref<3x32x256xbf16, #tpu.memory_space<vmem>>, vector<1x32x256xbf16>
    %13 = vector.shape_cast %12 : vector<1x32x256xbf16> to vector<32x256xbf16>
    %cst_17 = arith.constant dense<0.000000e+00> : vector<32x256xf32>
    %14 = tpu.matmul %11, %13, %cst_17 {dimension_numbers = #tpu.dot_dimension_numbers<[1], [0], [0], [1], [0, 0, 1, 1], [], []>} : vector<32x32xbf16>, vector<32x256xbf16>, vector<32x256xf32> -> vector<32x256xf32>
    %15 = arith.addf %9, %14 : vector<32x256xf32>
    %c0_18 = arith.constant 0 : index
    %c2 = arith.constant 2 : index
    %c0_19 = arith.constant 0 : index
    %16 = vector.load %arg1[%c0_18, %c2, %c0_19] : memref<4x10x32xbf16, #tpu.memory_space<vmem>>, vector<4x8x32xbf16>
    %17 = vector.shape_cast %16 : vector<4x8x32xbf16> to vector<32x32xbf16>
    %c2_20 = arith.constant 2 : index
    %c0_21 = arith.constant 0 : index
    %c0_22 = arith.constant 0 : index
    %18 = vector.load %arg2[%c2_20, %c0_21, %c0_22] : memref<3x32x256xbf16, #tpu.memory_space<vmem>>, vector<1x32x256xbf16>
    %19 = vector.shape_cast %18 : vector<1x32x256xbf16> to vector<32x256xbf16>
    %cst_23 = arith.constant dense<0.000000e+00> : vector<32x256xf32>
    %20 = tpu.matmul %17, %19, %cst_23 {dimension_numbers = #tpu.dot_dimension_numbers<[1], [0], [0], [1], [0, 0, 1, 1], [], []>} : vector<32x32xbf16>, vector<32x256xbf16>, vector<32x256xf32> -> vector<32x256xf32>
    %21 = arith.addf %15, %20 : vector<32x256xf32>
    %c0_24 = arith.constant 0 : index
    %c0_25 = arith.constant 0 : index
    %22 = vector.load %arg5[%c0_24, %c0_25] : memref<8x256xf32, #tpu.memory_space<vmem>>, vector<1x256xf32>
    %23 = vector.broadcast %22 : vector<1x256xf32> to vector<32x256xf32>
    %24 = arith.addf %21, %23 : vector<32x256xf32>
    %cst_26 = arith.constant 0.000000e+00 : f32
    %25 = vector.broadcast %cst_26 : f32 to vector<32x256xf32>
    %26 = arith.maximumf %24, %25 : vector<32x256xf32>
    %27 = vector.shape_cast %26 : vector<32x256xf32> to vector<4x8x256xf32>
    %28 = arith.truncf %27 : vector<4x8x256xf32> to vector<4x8x256xbf16>
    %c0_27 = arith.constant 0 : index
    %c1_28 = arith.constant 1 : index
    %c0_29 = arith.constant 0 : index
    %29 = vector.load %arg7[%c0_27, %c1_28, %c0_29] : memref<4x10x256xbf16, #tpu.memory_space<vmem>>, vector<4x8x256xbf16>
    tpu.vector_store %arg7[%c0_27, %c1_28, %c0_29], %28 {strides = array<i32>} : memref<4x10x256xbf16, #tpu.memory_space<vmem>>, vector<4x8x256xbf16>,
    %cst_30 = arith.constant 0.000000e+00 : f32
    %30 = vector.broadcast %cst_30 : f32 to vector<32x256xf32>
    %c0_31 = arith.constant 0 : index
    %c0_32 = arith.constant 0 : index
    %c0_33 = arith.constant 0 : index
    %31 = vector.load %arg7[%c0_31, %c0_32, %c0_33] : memref<4x10x256xbf16, #tpu.memory_space<vmem>>, vector<4x8x256xbf16>
    %32 = vector.shape_cast %31 : vector<4x8x256xbf16> to vector<32x256xbf16>
    %c0_34 = arith.constant 0 : index
    %c0_35 = arith.constant 0 : index
    %c0_36 = arith.constant 0 : index
    %33 = vector.load %arg3[%c0_34, %c0_35, %c0_36] : memref<3x256x256xbf16, #tpu.memory_space<vmem>>, vector<1x256x256xbf16>
    %34 = vector.shape_cast %33 : vector<1x256x256xbf16> to vector<256x256xbf16>
    %cst_37 = arith.constant dense<0.000000e+00> : vector<32x256xf32>
    %35 = tpu.matmul %32, %34, %cst_37 {dimension_numbers = #tpu.dot_dimension_numbers<[1], [0], [0], [1], [0, 0, 1, 1], [], []>} : vector<32x256xbf16>, vector<256x256xbf16>, vector<32x256xf32> -> vector<32x256xf32>
    %36 = arith.addf %30, %35 : vector<32x256xf32>
    %c0_38 = arith.constant 0 : index
    %c1_39 = arith.constant 1 : index
    %c0_40 = arith.constant 0 : index
    %37 = vector.load %arg7[%c0_38, %c1_39, %c0_40] : memref<4x10x256xbf16, #tpu.memory_space<vmem>>, vector<4x8x256xbf16>
    %38 = vector.shape_cast %37 : vector<4x8x256xbf16> to vector<32x256xbf16>
    %c1_41 = arith.constant 1 : index
    %c0_42 = arith.constant 0 : index
    %c0_43 = arith.constant 0 : index
    %39 = vector.load %arg3[%c1_41, %c0_42, %c0_43] : memref<3x256x256xbf16, #tpu.memory_space<vmem>>, vector<1x256x256xbf16>
    %40 = vector.shape_cast %39 : vector<1x256x256xbf16> to vector<256x256xbf16>
    %cst_44 = arith.constant dense<0.000000e+00> : vector<32x256xf32>
    %41 = tpu.matmul %38, %40, %cst_44 {dimension_numbers = #tpu.dot_dimension_numbers<[1], [0], [0], [1], [0, 0, 1, 1], [], []>} : vector<32x256xbf16>, vector<256x256xbf16>, vector<32x256xf32> -> vector<32x256xf32>
    %42 = arith.addf %36, %41 : vector<32x256xf32>
    %c0_45 = arith.constant 0 : index
    %c2_46 = arith.constant 2 : index
    %c0_47 = arith.constant 0 : index
    %43 = vector.load %arg7[%c0_45, %c2_46, %c0_47] : memref<4x10x256xbf16, #tpu.memory_space<vmem>>, vector<4x8x256xbf16>
    %44 = vector.shape_cast %43 : vector<4x8x256xbf16> to vector<32x256xbf16>
    %c2_48 = arith.constant 2 : index
    %c0_49 = arith.constant 0 : index
    %c0_50 = arith.constant 0 : index
    %45 = vector.load %arg3[%c2_48, %c0_49, %c0_50] : memref<3x256x256xbf16, #tpu.memory_space<vmem>>, vector<1x256x256xbf16>
    %46 = vector.shape_cast %45 : vector<1x256x256xbf16> to vector<256x256xbf16>
    %cst_51 = arith.constant dense<0.000000e+00> : vector<32x256xf32>
    %47 = tpu.matmul %44, %46, %cst_51 {dimension_numbers = #tpu.dot_dimension_numbers<[1], [0], [0], [1], [0, 0, 1, 1], [], []>} : vector<32x256xbf16>, vector<256x256xbf16>, vector<32x256xf32> -> vector<32x256xf32>
    %48 = arith.addf %42, %47 : vector<32x256xf32>
    %c1_52 = arith.constant 1 : index
    %c0_53 = arith.constant 0 : index
    %49 = vector.load %arg5[%c1_52, %c0_53] : memref<8x256xf32, #tpu.memory_space<vmem>>, vector<1x256xf32>
    %50 = vector.broadcast %49 : vector<1x256xf32> to vector<32x256xf32>
    %51 = arith.addf %48, %50 : vector<32x256xf32>
    %cst_54 = arith.constant 0.000000e+00 : f32
    %52 = vector.broadcast %cst_54 : f32 to vector<32x256xf32>
    %53 = arith.maximumf %51, %52 : vector<32x256xf32>
    %54 = vector.shape_cast %53 : vector<32x256xf32> to vector<4x8x256xf32>
    %55 = arith.truncf %54 : vector<4x8x256xf32> to vector<4x8x256xbf16>
    %c0_55 = arith.constant 0 : index
    %c1_56 = arith.constant 1 : index
    %c0_57 = arith.constant 0 : index
    %56 = vector.load %arg7[%c0_55, %c1_56, %c0_57] : memref<4x10x256xbf16, #tpu.memory_space<vmem>>, vector<4x8x256xbf16>
    tpu.vector_store %arg7[%c0_55, %c1_56, %c0_57], %55 {strides = array<i32>} : memref<4x10x256xbf16, #tpu.memory_space<vmem>>, vector<4x8x256xbf16>,
    %cst_58 = arith.constant 0.000000e+00 : f32
    %57 = vector.broadcast %cst_58 : f32 to vector<32x128xf32>
    %c0_59 = arith.constant 0 : index
    %c0_60 = arith.constant 0 : index
    %c0_61 = arith.constant 0 : index
    %58 = vector.load %arg7[%c0_59, %c0_60, %c0_61] : memref<4x10x256xbf16, #tpu.memory_space<vmem>>, vector<4x8x256xbf16>
    %59 = vector.shape_cast %58 : vector<4x8x256xbf16> to vector<32x256xbf16>
    %c0_62 = arith.constant 0 : index
    %c0_63 = arith.constant 0 : index
    %c0_64 = arith.constant 0 : index
    %60 = vector.load %arg4[%c0_62, %c0_63, %c0_64] : memref<3x256x128xbf16, #tpu.memory_space<vmem>>, vector<1x256x128xbf16>
    %61 = vector.shape_cast %60 : vector<1x256x128xbf16> to vector<256x128xbf16>
    %cst_65 = arith.constant dense<0.000000e+00> : vector<32x128xf32>
    %62 = tpu.matmul %59, %61, %cst_65 {dimension_numbers = #tpu.dot_dimension_numbers<[1], [0], [0], [1], [0, 0, 1, 1], [], []>} : vector<32x256xbf16>, vector<256x128xbf16>, vector<32x128xf32> -> vector<32x128xf32>
    %63 = arith.addf %57, %62 : vector<32x128xf32>
    %c0_66 = arith.constant 0 : index
    %c1_67 = arith.constant 1 : index
    %c0_68 = arith.constant 0 : index
    %64 = vector.load %arg7[%c0_66, %c1_67, %c0_68] : memref<4x10x256xbf16, #tpu.memory_space<vmem>>, vector<4x8x256xbf16>
    %65 = vector.shape_cast %64 : vector<4x8x256xbf16> to vector<32x256xbf16>
    %c1_69 = arith.constant 1 : index
    %c0_70 = arith.constant 0 : index
    %c0_71 = arith.constant 0 : index
    %66 = vector.load %arg4[%c1_69, %c0_70, %c0_71] : memref<3x256x128xbf16, #tpu.memory_space<vmem>>, vector<1x256x128xbf16>
    %67 = vector.shape_cast %66 : vector<1x256x128xbf16> to vector<256x128xbf16>
    %cst_72 = arith.constant dense<0.000000e+00> : vector<32x128xf32>
    %68 = tpu.matmul %65, %67, %cst_72 {dimension_numbers = #tpu.dot_dimension_numbers<[1], [0], [0], [1], [0, 0, 1, 1], [], []>} : vector<32x256xbf16>, vector<256x128xbf16>, vector<32x128xf32> -> vector<32x128xf32>
    %69 = arith.addf %63, %68 : vector<32x128xf32>
    %c0_73 = arith.constant 0 : index
    %c2_74 = arith.constant 2 : index
    %c0_75 = arith.constant 0 : index
    %70 = vector.load %arg7[%c0_73, %c2_74, %c0_75] : memref<4x10x256xbf16, #tpu.memory_space<vmem>>, vector<4x8x256xbf16>
    %71 = vector.shape_cast %70 : vector<4x8x256xbf16> to vector<32x256xbf16>
    %c2_76 = arith.constant 2 : index
    %c0_77 = arith.constant 0 : index
    %c0_78 = arith.constant 0 : index
    %72 = vector.load %arg4[%c2_76, %c0_77, %c0_78] : memref<3x256x128xbf16, #tpu.memory_space<vmem>>, vector<1x256x128xbf16>
    %73 = vector.shape_cast %72 : vector<1x256x128xbf16> to vector<256x128xbf16>
    %cst_79 = arith.constant dense<0.000000e+00> : vector<32x128xf32>
    %74 = tpu.matmul %71, %73, %cst_79 {dimension_numbers = #tpu.dot_dimension_numbers<[1], [0], [0], [1], [0, 0, 1, 1], [], []>} : vector<32x256xbf16>, vector<256x128xbf16>, vector<32x128xf32> -> vector<32x128xf32>
    %75 = arith.addf %69, %74 : vector<32x128xf32>
    %c2_80 = arith.constant 2 : index
    %c0_81 = arith.constant 0 : index
    %76 = vector.load %arg5[%c2_80, %c0_81] : memref<8x256xf32, #tpu.memory_space<vmem>>, vector<1x128xf32>
    %77 = vector.broadcast %76 : vector<1x128xf32> to vector<32x128xf32>
    %78 = arith.addf %75, %77 : vector<32x128xf32>
    %79 = arith.truncf %78 : vector<32x128xf32> to vector<32x128xbf16>
    %c0_82 = arith.constant 0 : index
    %c0_83 = arith.constant 0 : index
    %80 = vector.load %arg6[%c0_82, %c0_83] : memref<32x128xbf16, #tpu.memory_space<vmem>>, vector<32x128xbf16>
    tpu.vector_store %arg6[%c0_82, %c0_83], %79 {strides = array<i32>} : memref<32x128xbf16, #tpu.memory_space<vmem>>, vector<32x128xbf16>,
    return
  }
  func.func @transform_0(%arg0: i32) -> (i32, i32, i32) {
    %c0_i32 = arith.constant 0 : i32
    %c0_i32_0 = arith.constant 0 : i32
    %c0_i32_1 = arith.constant 0 : i32
    return %arg0, %c0_i32, %c0_i32_0 : i32, i32, i32
  }
  func.func @transform_1(%arg0: i32) -> (i32, i32, i32) {
    %c0_i32 = arith.constant 0 : i32
    %c0_i32_0 = arith.constant 0 : i32
    %c0_i32_1 = arith.constant 0 : i32
    %c0_i32_2 = arith.constant 0 : i32
    return %c0_i32, %c0_i32_0, %c0_i32_1 : i32, i32, i32
  }
  func.func @transform_2(%arg0: i32) -> (i32, i32, i32) {
    %c0_i32 = arith.constant 0 : i32
    %c0_i32_0 = arith.constant 0 : i32
    %c0_i32_1 = arith.constant 0 : i32
    %c0_i32_2 = arith.constant 0 : i32
    return %c0_i32, %c0_i32_0, %c0_i32_1 : i32, i32, i32
  }
  func.func @transform_3(%arg0: i32) -> (i32, i32, i32) {
    %c0_i32 = arith.constant 0 : i32
    %c0_i32_0 = arith.constant 0 : i32
    %c0_i32_1 = arith.constant 0 : i32
    %c0_i32_2 = arith.constant 0 : i32
    return %c0_i32, %c0_i32_0, %c0_i32_1 : i32, i32, i32
  }
  func.func @transform_4(%arg0: i32) -> (i32, i32) {
    %c0_i32 = arith.constant 0 : i32
    %c0_i32_0 = arith.constant 0 : i32
    %c0_i32_1 = arith.constant 0 : i32
    return %c0_i32, %c0_i32_0 : i32, i32
  }
  func.func @transform_5(%arg0: i32) -> (i32, i32) {
    %c0_i32 = arith.constant 0 : i32
    %c0_i32_0 = arith.constant 0 : i32
    return %arg0, %c0_i32 : i32, i32
  }
}

</mosaic_0001>

<llo_original>
// kernel: tile.18
$region0: #{tile.18}
  #allocation0 [shape = 's32[1]{0}', space=sflag, size = 0x4, scoped, tag = 'scoped memory for tile.18']
  %s0 = inlined_call_operand.vmem [shape: f32[32], index: 0, kind: input, shape index: {}]
  %s1 = inlined_call_operand.vmem [shape: f32[8,32], index: 1, kind: output, shape index: {}]
  // Predicated region
  $region2: #{tile.18} parent=0 // pred_check
    _
  $region3: #{tile.18} parent=0 // pred_check_branch
    %3 = sbr.rel (0) target = $region5
  $region4: #{tile.18} parent=0 // pred_region
    _
  $region5: #{tile.18} parent=0 // pred_fallthru
    _
  %v4 = vld [vmem:[%s0] ss:$0 sm:$0xff]
  %5 = vst [vmem:[%s1] sm:$0xff] %v4

// kernel: tile.28
$region0: #{tile.28}
  #allocation0 [shape = 's32[1]{0}', space=sflag, size = 0x4, scoped, tag = 'scoped memory for tile.28']
  %s0 = inlined_call_operand.vmem [shape: f32[16], index: 0, kind: input, shape index: {}]
  %s1 = inlined_call_operand.vmem [shape: f32[8,16], index: 1, kind: output, shape index: {}]
  // Predicated region
  $region2: #{tile.28} parent=0 // pred_check
    _
  $region3: #{tile.28} parent=0 // pred_check_branch
    %3 = sbr.rel (0) target = $region5
  $region4: #{tile.28} parent=0 // pred_region
    _
  $region5: #{tile.28} parent=0 // pred_fallthru
    _
  %v4 = vld [vmem:[%s0] ss:$0 sm:$0xff]
  %5 = vst [vmem:[%s1] sm:$0xff] %v4

// kernel: hier_rcnn_forward.1
$region0: #{hier_rcnn_forward.1}
  #allocation0 [shape = 'u32[]', space=smem, size = 0x4, offset = 0x4, fixed_abs, tag = 'smem constant byte address 0x4 - core index']
  #allocation1 [shape = 'u32[144,128]{1,0:T(1,128)}', space=vmem, size = 0x12000, scoped, tag = 'internal scratch']
  #allocation2 [shape = 'bf16[4,10,256]{2,1,0:T(8,128)(2,1)}', space=vmem, size = 0x8000, scoped, tag = 'scratch operand']
  %s0 = inlined_call_operand.vmem [shape: bf16[8,10,32], index: 0, kind: input, shape index: {}]
  %s1 = inlined_call_operand.vmem [shape: bf16[3,32,256], index: 1, kind: input, shape index: {}]
  %s2 = inlined_call_operand.vmem [shape: bf16[3,256,256], index: 2, kind: input, shape index: {}]
  %s3 = inlined_call_operand.vmem [shape: bf16[3,256,128], index: 3, kind: input, shape index: {}]
  %s4 = inlined_call_operand.vmem [shape: f32[8,256], index: 4, kind: input, shape index: {}]
  %s5 = inlined_call_operand.vmem [shape: bf16[64,128], index: 5, kind: output, shape index: {}]
  %s6 = sld [smem:[#allocation0]]
  $region53: #{hier_rcnn_forward.1} parent=0
    _
  %s8 = ssub.s32 1, %s6
  %s9 = scalar_select 0, %s8, %s6
  loop: start=0, step=1, limit=4
  $region2: #{hier_rcnn_forward.1} parent=0 // loop_pre_header
    _
  $region3: #{hier_rcnn_forward.1} parent=0 // loop_header
    %s11 = sphi 0, %s15
    %p12 = scmp.ge.s32.totalorder %s11, 4
    %s21 = sphi 0, %s23
    %s24 = sphi 0, %s21
    %s25 = sphi 0, %s24
    %s41 = sphi 0, %s25
    %s45 = sphi 0, %s45
    %s47 = sphi 0, %s45
    %s48 = sphi 0, %s47
    %s62 = sphi 0, %s48
    %s66 = sphi 0, %s66
    %s68 = sphi 0, %s66
    %s69 = sphi 0, %s68
    %s83 = sphi 0, %s69
    %s87 = sphi 0, %s87
    %s89 = sphi 0, %s87
    %s90 = sphi 0, %s89
    %s104 = sphi 0, %s90
    %s108 = sphi 0, %s108
    %s110 = sphi 0, %s108
    %s111 = sphi 0, %s110
    %s125 = sphi 0, %s111
    %s131 = sphi 0, %s133
    %s134 = sphi 0, %s131
    %s135 = sphi 0, %s134
    %s151 = sphi 0, %s135
  $region4: #{hier_rcnn_forward.1} parent=0 // loop_header_branch
    %14 = sbr.rel (%p12) target = $region8
  $region5: #{hier_rcnn_forward.1} parent=0 // loop_body
    %s16 = ssub.s32 %s11, 1
    %s17 = ssub.s32 %s11, 2
    %s18 = sadd.s32 %s11, 1
    %s19 = ssub.s32 %s11, %s18
    %p20 = scmp.eq.s32.totalorder %s19, 0
    %s22 = sadd.s32 %s21, 1
    %s23 = scalar_select %p20, %s21, %s22
    %p26 = pneg %p20
    %p27 = scmp.eq.s32.totalorder %s11, 1
    %p28 = por %p26, %p27
    %p29 = scmp.ne.s32.totalorder %s21, %s24
    %p30 = scmp.eq.s32.totalorder %s11, 0
    %p31 = por %p29, %p30
    %p32 = scmp.ne.s32.totalorder %s21, %s24
    %p33 = scmp.eq.s32.totalorder %s16, 1
    %p34 = por %p32, %p33
    %p35 = scmp.ne.s32.totalorder %s24, %s25
    %p36 = scmp.eq.s32.totalorder %s16, 0
    %p37 = por %p35, %p36
    %p38 = scmp.ne.s32.totalorder %s24, %s25
    %p39 = scmp.eq.s32.totalorder %s17, 1
    %p40 = por %p38, %p39
    %p42 = scmp.ne.s32.totalorder %s25, %s41
    %p43 = scmp.eq.s32.totalorder %s17, 0
    %p44 = por %p42, %p43
    %s46 = sadd.s32 %s45, 1
    %p49 = scmp.eq.s32.totalorder %s11, 1
    %p50 = scmp.ne.s32.totalorder %s45, %s47
    %p51 = scmp.eq.s32.totalorder %s11, 0
    %p52 = por %p50, %p51
    %p53 = scmp.ne.s32.totalorder %s45, %s47
    %p54 = scmp.eq.s32.totalorder %s16, 1
    %p55 = por %p53, %p54
    %p56 = scmp.ne.s32.totalorder %s47, %s48
    %p57 = scmp.eq.s32.totalorder %s16, 0
    %p58 = por %p56, %p57
    %p59 = scmp.ne.s32.totalorder %s47, %s48
    %p60 = scmp.eq.s32.totalorder %s17, 1
    %p61 = por %p59, %p60
    %p63 = scmp.ne.s32.totalorder %s48, %s62
    %p64 = scmp.eq.s32.totalorder %s17, 0
    %p65 = por %p63, %p64
    %s67 = sadd.s32 %s66, 1
    %p70 = scmp.eq.s32.totalorder %s11, 1
    %p71 = scmp.ne.s32.totalorder %s66, %s68
    %p72 = scmp.eq.s32.totalorder %s11, 0
    %p73 = por %p71, %p72
    %p74 = scmp.ne.s32.totalorder %s66, %s68
    %p75 = scmp.eq.s32.totalorder %s16, 1
    %p76 = por %p74, %p75
    %p77 = scmp.ne.s32.totalorder %s68, %s69
    %p78 = scmp.eq.s32.totalorder %s16, 0
    %p79 = por %p77, %p78
    %p80 = scmp.ne.s32.totalorder %s68, %s69
    %p81 = scmp.eq.s32.totalorder %s17, 1
    %p82 = por %p80, %p81
    %p84 = scmp.ne.s32.totalorder %s69, %s83
    %p85 = scmp.eq.s32.totalorder %s17, 0
    %p86 = por %p84, %p85
    %s88 = sadd.s32 %s87, 1
    %p91 = scmp.eq.s32.totalorder %s11, 1
    %p92 = scmp.ne.s32.totalorder %s87, %s89
    %p93 = scmp.eq.s32.totalorder %s11, 0
    %p94 = por %p92, %p93
    %p95 = scmp.ne.s32.totalorder %s87, %s89
    %p96 = scmp.eq.s32.totalorder %s16, 1
    %p97 = por %p95, %p96
    %p98 = scmp.ne.s32.totalorder %s89, %s90
    %p99 = scmp.eq.s32.totalorder %s16, 0
    %p100 = por %p98, %p99
    %p101 = scmp.ne.s32.totalorder %s89, %s90
    %p102 = scmp.eq.s32.totalorder %s17, 1
    %p103 = por %p101, %p102
    %p105 = scmp.ne.s32.totalorder %s90, %s104
    %p106 = scmp.eq.s32.totalorder %s17, 0
    %p107 = por %p105, %p106
    %s109 = sadd.s32 %s108, 1
    %p112 = scmp.eq.s32.totalorder %s11, 1
    %p113 = scmp.ne.s32.totalorder %s108, %s110
    %p114 = scmp.eq.s32.totalorder %s11, 0
    %p115 = por %p113, %p114
    %p116 = scmp.ne.s32.totalorder %s108, %s110
    %p117 = scmp.eq.s32.totalorder %s16, 1
    %p118 = por %p116, %p117
    %p119 = scmp.ne.s32.totalorder %s110, %s111
    %p120 = scmp.eq.s32.totalorder %s16, 0
    %p121 = por %p119, %p120
    %p122 = scmp.ne.s32.totalorder %s110, %s111
    %p123 = scmp.eq.s32.totalorder %s17, 1
    %p124 = por %p122, %p123
    %p126 = scmp.ne.s32.totalorder %s111, %s125
    %p127 = scmp.eq.s32.totalorder %s17, 0
    %p128 = por %p126, %p127
    %s129 = ssub.s32 %s11, %s18
    %p130 = scmp.eq.s32.totalorder %s129, 0
    %s132 = sadd.s32 %s131, 1
    %s133 = scalar_select %p130, %s131, %s132
    %p136 = pneg %p130
    %p137 = scmp.eq.s32.totalorder %s11, 1
    %p138 = por %p136, %p137
    %p139 = scmp.ne.s32.totalorder %s131, %s134
    %p140 = scmp.eq.s32.totalorder %s11, 0
    %p141 = por %p139, %p140
    %p142 = scmp.ne.s32.totalorder %s131, %s134
    %p143 = scmp.eq.s32.totalorder %s16, 1
    %p144 = por %p142, %p143
    %p145 = scmp.ne.s32.totalorder %s134, %s135
    %p146 = scmp.eq.s32.totalorder %s16, 0
    %p147 = por %p145, %p146
    %p148 = scmp.ne.s32.totalorder %s134, %s135
    %p149 = scmp.eq.s32.totalorder %s17, 1
    %p150 = por %p148, %p149
    %p152 = scmp.ne.s32.totalorder %s135, %s151
    %p153 = scmp.eq.s32.totalorder %s17, 0
    %p154 = por %p152, %p153
    %p155 = scmp.le.s32.totalorder 1, %s11
    %p156 = scmp.lt.s32.totalorder %s11, 3
    %p157 = pnand %p155, %p156
    %p158 = pneg %p157
    // Predicated region
    $region9: #{hier_rcnn_forward.1} parent=5 // pred_check
      _
    $region10: #{hier_rcnn_forward.1} parent=5 // pred_check_branch
      %160 = sbr.rel (%p157) target = $region12
    $region11: #{hier_rcnn_forward.1} parent=5 // pred_region
      %s161 = ssub.s32 %s11, 1
      // Predicated region
      $region13: #{hier_rcnn_forward.1} parent=11 // pred_check
        %p162 = pneg %p58
      $region14: #{hier_rcnn_forward.1} parent=11 // pred_check_branch
        %164 = sbr.rel (%p162) target = $region16
      $region15: #{hier_rcnn_forward.1} parent=11 // pred_region
        _
      $region16: #{hier_rcnn_forward.1} parent=11 // pred_fallthru
        _
      // Predicated region
      $region17: #{hier_rcnn_forward.1} parent=11 // pred_check
        %p165 = pneg %p79
      $region18: #{hier_rcnn_forward.1} parent=11 // pred_check_branch
        %167 = sbr.rel (%p165) target = $region20
      $region19: #{hier_rcnn_forward.1} parent=11 // pred_region
        _
      $region20: #{hier_rcnn_forward.1} parent=11 // pred_fallthru
        _
      // Predicated region
      $region21: #{hier_rcnn_forward.1} parent=11 // pred_check
        %p168 = pneg %p100
      $region22: #{hier_rcnn_forward.1} parent=11 // pred_check_branch
        %170 = sbr.rel (%p168) target = $region24
      $region23: #{hier_rcnn_forward.1} parent=11 // pred_region
        _
      $region24: #{hier_rcnn_forward.1} parent=11 // pred_fallthru
        _
      // Predicated region
      $region25: #{hier_rcnn_forward.1} parent=11 // pred_check
        %p171 = pneg %p121
      $region26: #{hier_rcnn_forward.1} parent=11 // pred_check_branch
        %173 = sbr.rel (%p171) target = $region28
      $region27: #{hier_rcnn_forward.1} parent=11 // pred_region
        _
      $region28: #{hier_rcnn_forward.1} parent=11 // pred_fallthru
        _
    $region12: #{hier_rcnn_forward.1} parent=5 // pred_fallthru
      _
    %p174 = scmp.lt.s32.totalorder %s11, 2
    // Predicated region
    $region29: #{hier_rcnn_forward.1} parent=5 // pred_check
      %p175 = pneg %p174
    $region30: #{hier_rcnn_forward.1} parent=5 // pred_check_branch
      %177 = sbr.rel (%p175) target = $region32
    $region31: #{hier_rcnn_forward.1} parent=5 // pred_region
      // Predicated region
      $region33: #{hier_rcnn_forward.1} parent=31 // pred_check
        %p178 = pneg %p31
      $region34: #{hier_rcnn_forward.1} parent=31 // pred_check_branch
        %180 = sbr.rel (%p178) target = $region36
      $region35: #{hier_rcnn_forward.1} parent=31 // pred_region
        %s181 = smul.u32 4, %s11
        %p182 = scmp.lt.s32.totalorder %s181, 7
        %s183 = scalar_select %p182, %s181, 7
        %s184 = smul.addr %s183, 2
        %s185 = smul.addr %s184, 4
        %s186 = scalar_lea.vmem %s0, %s185
        %s187 = smul.u32 4, %s11
      $region36: #{hier_rcnn_forward.1} parent=31 // pred_fallthru
        _
    $region32: #{hier_rcnn_forward.1} parent=5 // pred_fallthru
      _
    %p188 = scmp.le.s32.totalorder 1, %s11
    %p189 = scmp.lt.s32.totalorder %s11, 3
    %p190 = pnand %p188, %p189
    %p191 = pneg %p190
    // Predicated region
    $region37: #{hier_rcnn_forward.1} parent=5 // pred_check
      _
    $region38: #{hier_rcnn_forward.1} parent=5 // pred_check_branch
      %193 = sbr.rel (%p190) target = $region40
    $region39: #{hier_rcnn_forward.1} parent=5 // pred_region
      %s194 = ssub.s32 %s11, 1
      %s195 = smul.u32 4, %s16
      %p196 = scmp.lt.s32.totalorder %s195, 7
      %s197 = scalar_select %p196, %s195, 7
      %s198 = smul.addr %s197, 2
      %s199 = smul.addr %s198, 4
      %s200 = scalar_lea.vmem %s0, %s199
      %p201 = pneg %p37
      %p202 = pneg %p34
      %p203 = pneg %p58
      %p204 = pneg %p55
      %p205 = pneg %p79
      %p206 = pneg %p76
      %p207 = pneg %p100
      %p208 = pneg %p97
      %p209 = pneg %p121
      %p210 = pneg %p118
      %p211 = pneg %p147
      %p212 = pneg %p144
      %s213 = smul.u32 4, %s16
      %p214 = scmp.lt.s32.totalorder %s213, 7
      %s215 = scalar_select %p214, %s213, 7
      %s216 = smul.addr %s215, 4
      %s217 = scalar_lea.vmem %s5, %s216
      %s218 = smul.u32 4, %s16
      %p219 = scmp.lt.s32.totalorder %s218, 7
      %s220 = scalar_select %p219, %s218, 7
      %s221 = smul.addr %s220, 2
      %s222 = smul.addr %s221, 4
      %s223 = scalar_lea.vmem %s0, %s222
      %s224 = smul.u32 4, %s16
      %s225 = smul.u32 4, %s16
      %p226 = scmp.lt.s32.totalorder %s225, 7
      %s227 = scalar_select %p226, %s225, 7
      %s228 = smul.addr %s227, 4
      %s229 = scalar_lea.vmem %s5, %s228
      %s230 = smul.u32 4, %s16
      %vm232 = vcmask 1040384
      %vm233 = vsmask.f32 256
      %vm234 = vmand %vm232, %vm233
      %vm235 = vcmask 1044484
      %vm236 = vsmask.f32 4352
      %vm237 = vmand %vm235, %vm236
      %vm238 = vmor %vm237, %vm234
      %v239 = vld [vmem:[#allocation2] sm:$0x11]
      %v240 = vsel %vm238, 0, %v239
      %241 = vst [vmem:[#allocation2] sm:$0x11] %v240
      %v242 = vld [vmem:[#allocation2 + $0x10] sm:$0x11]
      %v243 = vsel %vm238, 0, %v242
      %244 = vst [vmem:[#allocation2 + $0x10] sm:$0x11] %v243
      %v245 = vld [vmem:[#allocation2 + $0x20] sm:$0x11]
      %v246 = vsel %vm238, 0, %v245
      %247 = vst [vmem:[#allocation2 + $0x20] sm:$0x11] %v246
      %v248 = vld [vmem:[#allocation2 + $0x30] sm:$0x11]
      %v249 = vsel %vm238, 0, %v248
      %250 = vst [vmem:[#allocation2 + $0x30] sm:$0x11] %v249
      %vm251 = vsmask.f32 7938
      %vm252 = vmand %vm232, %vm251
      %vm253 = vsmask.f32 7954
      %vm254 = vmand %vm235, %vm253
      %vm255 = vmor %vm254, %vm252
      %v256 = vld [vmem:[#allocation2 + $0x8] sm:$0x11]
      %v257 = vsel %vm255, 0, %v256
      %258 = vst [vmem:[#allocation2 + $0x8] sm:$0x11] %v257
      %v259 = vld [vmem:[#allocation2 + $0x18] sm:$0x11]
      %v260 = vsel %vm255, 0, %v259
      %261 = vst [vmem:[#allocation2 + $0x18] sm:$0x11] %v260
      %v262 = vld [vmem:[#allocation2 + $0x28] sm:$0x11]
      %v263 = vsel %vm255, 0, %v262
      %264 = vst [vmem:[#allocation2 + $0x28] sm:$0x11] %v263
      %v265 = vld [vmem:[#allocation2 + $0x38] sm:$0x11]
      %v266 = vsel %vm255, 0, %v265
      %267 = vst [vmem:[#allocation2 + $0x38] sm:$0x11] %v266
      %v268 = vld [vmem:[%s223] sm:$0xf]
      %v269 = vld [vmem:[%s223 + $0x8] sm:$0xf]
      %v270 = vld [vmem:[%s223 + $0x10] sm:$0xf]
      %v271 = vld [vmem:[%s223 + $0x18] sm:$0xf]
      %v272 = vld [vmem:[%s1] sm:$0xff]
      %v273 = vld [vmem:[%s1 + $0x8] sm:$0xff]
      %v274 = vld [vmem:[%s1 + $0x10] sm:$0xff]
      %v275 = vld [vmem:[%s1 + $0x18] sm:$0xff]
      %v276 = vld [vmem:[%s223 + $0x4] sm:$0x1]
      %v277 = vld [vmem:[%s223 + $0xc] sm:$0x1]
      %v278 = vld [vmem:[%s223 + $0x14] sm:$0x1]
      %v279 = vld [vmem:[%s223 + $0x1c] sm:$0x1]
      %vm280 = vsmask.f32 3328
      %vm281 = vsmask.f32 7440
      %vm282 = vmor %vm280, %vm281
      %v284 = vshrl.u32 %v268, 16
      %v286 = vrot.slane %v284, 4
      %v287 = vshll.u32 %v268, 16
      %v289 = vrot.slane %v287, 5
      %v290 = vor.u32 %v286, %v289
      %v291 = vrot.slane %v290, 4
      %v293 = vshll.u32 %v276, 16
      %v295 = vrot.slane %v293, 5
      %v296 = vsel %vm282, %v291, %v295
      %v298 = vshrl.u32 %v269, 16
      %v300 = vrot.slane %v298, 4
      %v301 = vshll.u32 %v269, 16
      %v303 = vrot.slane %v301, 5
      %v304 = vor.u32 %v300, %v303
      %v305 = vrot.slane %v304, 4
      %v307 = vshll.u32 %v277, 16
      %v309 = vrot.slane %v307, 5
      %v310 = vsel %vm282, %v305, %v309
      %v312 = vshrl.u32 %v270, 16
      %v314 = vrot.slane %v312, 4
      %v315 = vshll.u32 %v270, 16
      %v317 = vrot.slane %v315, 5
      %v318 = vor.u32 %v314, %v317
      %v319 = vrot.slane %v318, 4
      %v321 = vshll.u32 %v278, 16
      %v323 = vrot.slane %v321, 5
      %v324 = vsel %vm282, %v319, %v323
      %v326 = vshrl.u32 %v271, 16
      %v328 = vrot.slane %v326, 4
      %v329 = vshll.u32 %v271, 16
      %v331 = vrot.slane %v329, 5
      %v332 = vor.u32 %v328, %v331
      %v333 = vrot.slane %v332, 4
      %v335 = vshll.u32 %v279, 16
      %v337 = vrot.slane %v335, 5
      %v338 = vsel %vm282, %v333, %v337
      %s339 = scalar_lea.vmem %s1, 32
      %v340 = vld [vmem:[%s339] sm:$0xff]
      %v341 = vld [vmem:[%s339 + $0x8] sm:$0xff]
      %v342 = vld [vmem:[%s339 + $0x10] sm:$0xff]
      %v343 = vld [vmem:[%s339 + $0x18] sm:$0xff]
      %v344 = vunpack.c.l.b16 %v296
      %v345 = vunpack.c.l.b16 %v310
      %v346 = vunpack.c.l.b16 %v324
      %v347 = vunpack.c.l.b16 %v338
      %v348 = vpack.c.b16 %v345, %v344
      %v349 = vpack.c.b16 %v347, %v346
      %v354 = vunpack.c.l.b16 %v340
      %v355 = vunpack.c.h.b16 %v340
      %v356 = vunpack.c.l.b16 %v341
      %v357 = vunpack.c.h.b16 %v341
      %v358 = vunpack.c.l.b16 %v342
      %v359 = vunpack.c.h.b16 %v342
      %v360 = vunpack.c.l.b16 %v343
      %v361 = vunpack.c.h.b16 %v343
      %v362 = vpack.c.b16 %v356, %v354
      %v363 = vpack.c.b16 %v357, %v355
      %v364 = vpack.c.b16 %v360, %v358
      %v365 = vpack.c.b16 %v361, %v359
      %vm370 = vcmask 261120
      %v372 = vsel %vm370, %v348, 0
      %v375 = vsel %vm370, %v349, 0
      %377 = vmatprep.subr.bf16.mxu0 %v363
      %378 = vmatpush1.bf16.msra.mxu0 %v362
      %379 = vmatprep.subr.bf16.mxu0 %v365
      %380 = vmatpush1.bf16.msra.mxu0 %v364
      %381 = vmatprep.subr.bf16.mxu0 0
      %382 = vmatpush1.bf16.msra.mxu0 0
      %383 = vmatprep.subr.bf16.mxu0 0
      %384 = vmatpush1.bf16.msra.mxu0 0
      %385 = vmatprep.subr.bf16.mxu0 0
      %386 = vmatpush1.bf16.msra.mxu0 0
      %387 = vmatprep.subr.bf16.mxu0 0
      %388 = vmatpush1.bf16.msra.mxu0 0
      %389 = vmatprep.subr.bf16.mxu0 0
      %390 = vmatpush1.bf16.msra.mxu0 0
      %391 = vmatprep.subr.bf16.mxu0 0
      %392 = vmatpush1.bf16.msra.mxu0 0
      %393 = vmatprep.subr.bf16.mxu0 0
      %394 = vmatpush1.bf16.msra.mxu0 0
      %395 = vmatprep.subr.bf16.mxu0 0
      %396 = vmatpush1.bf16.msra.mxu0 0
      %397 = vmatprep.subr.bf16.mxu0 0
      %398 = vmatpush1.bf16.msra.mxu0 0
      %399 = vmatprep.subr.bf16.mxu0 0
      %400 = vmatpush1.bf16.msra.mxu0 0
      %401 = vmatprep.subr.bf16.mxu0 0
      %402 = vmatpush1.bf16.msra.mxu0 0
      %403 = vmatprep.subr.bf16.mxu0 0
      %404 = vmatpush1.bf16.msra.mxu0 0
      %405 = vmatprep.subr.bf16.mxu0 0
      %406 = vmatpush1.bf16.msra.mxu0 0
      %407 = vmatprep.subr.bf16.mxu0 0
      %408 = vmatpush1.bf16.msra.mxu0 0
      %409 = vmatprep.mubr.bf16.mxu0 0
      %410 = vmatmul.mubr.bf16.gmra.mrb[0].mxu0 %v372
      %v411 = vpop.f32.mrb[0].mxu0
      %v412 = vadd.f32 0.0, %v411
      %v413 = vpop.f32.mrb[0].mxu0
      %v414 = vadd.f32 0.0, %v413
      %v415 = vpop.f32.mrb[0].mxu0
      %v416 = vadd.f32 0.0, %v415
      %v417 = vpop.f32.mrb[0].mxu0
      %v418 = vadd.f32 0.0, %v417
      %419 = vmatprep.mubr.bf16.mxu0 0
      %420 = vmatmul.mubr.bf16.gmra.mrb[0].mxu0 %v375
      %v421 = vpop.f32.mrb[0].mxu0
      %v422 = vadd.f32 0.0, %v421
      %v423 = vpop.f32.mrb[0].mxu0
      %v424 = vadd.f32 0.0, %v423
      %v425 = vpop.f32.mrb[0].mxu0
      %v426 = vadd.f32 0.0, %v425
      %v427 = vpop.f32.mrb[0].mxu0
      %v428 = vadd.f32 0.0, %v427
      %429 = vdwg.mxu0
      %v434 = vunpack.c.l.b16 %v268
      %v435 = vunpack.c.l.b16 %v269
      %v436 = vunpack.c.l.b16 %v270
      %v437 = vunpack.c.l.b16 %v271
      %v438 = vpack.c.b16 %v435, %v434
      %v439 = vpack.c.b16 %v437, %v436
      %v444 = vunpack.c.l.b16 %v272
      %v445 = vunpack.c.h.b16 %v272
      %v446 = vunpack.c.l.b16 %v273
      %v447 = vunpack.c.h.b16 %v273
      %v448 = vunpack.c.l.b16 %v274
      %v449 = vunpack.c.h.b16 %v274
      %v450 = vunpack.c.l.b16 %v275
      %v451 = vunpack.c.h.b16 %v275
      %v452 = vpack.c.b16 %v446, %v444
      %v453 = vpack.c.b16 %v447, %v445
      %v454 = vpack.c.b16 %v450, %v448
      %v455 = vpack.c.b16 %v451, %v449
      %v461 = vsel %vm370, %v438, 0
      %v464 = vsel %vm370, %v439, 0
      %466 = vmatprep.subr.bf16.mxu0 %v453
      %467 = vmatpush1.bf16.msra.mxu0 %v452
      %468 = vmatprep.subr.bf16.mxu0 %v455
      %469 = vmatpush1.bf16.msra.mxu0 %v454
      %470 = vmatprep.subr.bf16.mxu0 0
      %471 = vmatpush1.bf16.msra.mxu0 0
      %472 = vmatprep.subr.bf16.mxu0 0
      %473 = vmatpush1.bf16.msra.mxu0 0
      %474 = vmatprep.subr.bf16.mxu0 0
      %475 = vmatpush1.bf16.msra.mxu0 0
      %476 = vmatprep.subr.bf16.mxu0 0
      %477 = vmatpush1.bf16.msra.mxu0 0
      %478 = vmatprep.subr.bf16.mxu0 0
      %479 = vmatpush1.bf16.msra.mxu0 0
      %480 = vmatprep.subr.bf16.mxu0 0
      %481 = vmatpush1.bf16.msra.mxu0 0
      %482 = vmatprep.subr.bf16.mxu0 0
      %483 = vmatpush1.bf16.msra.mxu0 0
      %484 = vmatprep.subr.bf16.mxu0 0
      %485 = vmatpush1.bf16.msra.mxu0 0
      %486 = vmatprep.subr.bf16.mxu0 0
      %487 = vmatpush1.bf16.msra.mxu0 0
      %488 = vmatprep.subr.bf16.mxu0 0
      %489 = vmatpush1.bf16.msra.mxu0 0
      %490 = vmatprep.subr.bf16.mxu0 0
      %491 = vmatpush1.bf16.msra.mxu0 0
      %492 = vmatprep.subr.bf16.mxu0 0
      %493 = vmatpush1.bf16.msra.mxu0 0
      %494 = vmatprep.subr.bf16.mxu0 0
      %495 = vmatpush1.bf16.msra.mxu0 0
      %496 = vmatprep.subr.bf16.mxu0 0
      %497 = vmatpush1.bf16.msra.mxu0 0
      %498 = vmatprep.mubr.bf16.mxu0 0
      %499 = vmatmul.mubr.bf16.gmra.mrb[0].mxu0 %v461
      %v500 = vpop.f32.mrb[0].mxu0
      %v501 = vadd.f32 %v412, %v500
      %v502 = vpop.f32.mrb[0].mxu0
      %v503 = vadd.f32 %v414, %v502
      %v504 = vpop.f32.mrb[0].mxu0
      %v505 = vadd.f32 %v416, %v504
      %v506 = vpop.f32.mrb[0].mxu0
      %v507 = vadd.f32 %v418, %v506
      %508 = vmatprep.mubr.bf16.mxu0 0
      %509 = vmatmul.mubr.bf16.gmra.mrb[0].mxu0 %v464
      %v510 = vpop.f32.mrb[0].mxu0
      %v511 = vadd.f32 %v422, %v510
      %v512 = vpop.f32.mrb[0].mxu0
      %v513 = vadd.f32 %v424, %v512
      %v514 = vpop.f32.mrb[0].mxu0
      %v515 = vadd.f32 %v426, %v514
      %v516 = vpop.f32.mrb[0].mxu0
      %v517 = vadd.f32 %v428, %v516
      %518 = vdwg.mxu0
      %v519 = vld [vmem:[%s223] sm:$0xe]
      %v520 = vld [vmem:[%s223 + $0x8] sm:$0xe]
      %v521 = vld [vmem:[%s223 + $0x10] sm:$0xe]
      %v522 = vld [vmem:[%s223 + $0x18] sm:$0xe]
      %vm531 = vcmask 1042432
      %vm532 = vcmask 1046532
      %vm533 = vmor %vm531, %vm532
      %v534 = vrot.slane %v519, 5
      %v535 = vrot.slane %v534, 4
      %v536 = vrot.slane %v276, 5
      %v537 = vsel %vm533, %v535, %v536
      %v538 = vrot.slane %v520, 5
      %v539 = vrot.slane %v538, 4
      %v540 = vrot.slane %v277, 5
      %v541 = vsel %vm533, %v539, %v540
      %v542 = vrot.slane %v521, 5
      %v543 = vrot.slane %v542, 4
      %v544 = vrot.slane %v278, 5
      %v545 = vsel %vm533, %v543, %v544
      %v546 = vrot.slane %v522, 5
      %v547 = vrot.slane %v546, 4
      %v548 = vrot.slane %v279, 5
      %v549 = vsel %vm533, %v547, %v548
      %s550 = scalar_lea.vmem %s1, 64
      %v551 = vld [vmem:[%s550] sm:$0xff]
      %v552 = vld [vmem:[%s550 + $0x8] sm:$0xff]
      %v553 = vld [vmem:[%s550 + $0x10] sm:$0xff]
      %v554 = vld [vmem:[%s550 + $0x18] sm:$0xff]
      %v555 = vunpack.c.l.b16 %v537
      %v556 = vunpack.c.l.b16 %v541
      %v557 = vunpack.c.l.b16 %v545
      %v558 = vunpack.c.l.b16 %v549
      %v559 = vpack.c.b16 %v556, %v555
      %v560 = vpack.c.b16 %v558, %v557
      %v565 = vunpack.c.l.b16 %v551
      %v566 = vunpack.c.h.b16 %v551
      %v567 = vunpack.c.l.b16 %v552
      %v568 = vunpack.c.h.b16 %v552
      %v569 = vunpack.c.l.b16 %v553
      %v570 = vunpack.c.h.b16 %v553
      %v571 = vunpack.c.l.b16 %v554
      %v572 = vunpack.c.h.b16 %v554
      %v573 = vpack.c.b16 %v567, %v565
      %v574 = vpack.c.b16 %v568, %v566
      %v575 = vpack.c.b16 %v571, %v569
      %v576 = vpack.c.b16 %v572, %v570
      %v582 = vsel %vm370, %v559, 0
      %v585 = vsel %vm370, %v560, 0
      %587 = vmatprep.subr.bf16.mxu0 %v574
      %588 = vmatpush1.bf16.msra.mxu0 %v573
      %589 = vmatprep.subr.bf16.mxu0 %v576
      %590 = vmatpush1.bf16.msra.mxu0 %v575
      %591 = vmatprep.subr.bf16.mxu0 0
      %592 = vmatpush1.bf16.msra.mxu0 0
      %593 = vmatprep.subr.bf16.mxu0 0
      %594 = vmatpush1.bf16.msra.mxu0 0
      %595 = vmatprep.subr.bf16.mxu0 0
      %596 = vmatpush1.bf16.msra.mxu0 0
      %597 = vmatprep.subr.bf16.mxu0 0
      %598 = vmatpush1.bf16.msra.mxu0 0
      %599 = vmatprep.subr.bf16.mxu0 0
      %600 = vmatpush1.bf16.msra.mxu0 0
      %601 = vmatprep.subr.bf16.mxu0 0
      %602 = vmatpush1.bf16.msra.mxu0 0
      %603 = vmatprep.subr.bf16.mxu0 0
      %604 = vmatpush1.bf16.msra.mxu0 0
      %605 = vmatprep.subr.bf16.mxu0 0
      %606 = vmatpush1.bf16.msra.mxu0 0
      %607 = vmatprep.subr.bf16.mxu0 0
      %608 = vmatpush1.bf16.msra.mxu0 0
      %609 = vmatprep.subr.bf16.mxu0 0
      %610 = vmatpush1.bf16.msra.mxu0 0
      %611 = vmatprep.subr.bf16.mxu0 0
      %612 = vmatpush1.bf16.msra.mxu0 0
      %613 = vmatprep.subr.bf16.mxu0 0
      %614 = vmatpush1.bf16.msra.mxu0 0
      %615 = vmatprep.subr.bf16.mxu0 0
      %616 = vmatpush1.bf16.msra.mxu0 0
      %617 = vmatprep.subr.bf16.mxu0 0
      %618 = vmatpush1.bf16.msra.mxu0 0
      %619 = vmatprep.mubr.bf16.mxu0 0
      %620 = vmatmul.mubr.bf16.gmra.mrb[0].mxu0 %v582
      %v621 = vpop.f32.mrb[0].mxu0
      %v622 = vadd.f32 0.0, %v621
      %v623 = vpop.f32.mrb[0].mxu0
      %v624 = vadd.f32 0.0, %v623
      %v625 = vpop.f32.mrb[0].mxu0
      %v626 = vadd.f32 0.0, %v625
      %v627 = vpop.f32.mrb[0].mxu0
      %v628 = vadd.f32 0.0, %v627
      %629 = vmatprep.mubr.bf16.mxu0 0
      %630 = vmatmul.mubr.bf16.gmra.mrb[0].mxu0 %v585
      %v631 = vpop.f32.mrb[0].mxu0
      %v632 = vadd.f32 0.0, %v631
      %v633 = vpop.f32.mrb[0].mxu0
      %v634 = vadd.f32 0.0, %v633
      %v635 = vpop.f32.mrb[0].mxu0
      %v636 = vadd.f32 0.0, %v635
      %v637 = vpop.f32.mrb[0].mxu0
      %v638 = vadd.f32 0.0, %v637
      %639 = vdwg.mxu0
      %v640 = vadd.f32 %v501, %v622
      %v641 = vadd.f32 %v503, %v624
      %v642 = vadd.f32 %v505, %v626
      %v643 = vadd.f32 %v507, %v628
      %v644 = vadd.f32 %v511, %v632
      %v645 = vadd.f32 %v513, %v634
      %v646 = vadd.f32 %v515, %v636
      %v647 = vadd.f32 %v517, %v638
      %v648 = vld [vmem:[%s4] ss:$8 sm:$0x3]
      %v650 = vlaneseq
      %v651 = vshrl.u32 %v650, 7
      %v652 = vsub.s32 0, %v651
      %v653 = vrot.slane %v648, %v652
      %v654 = vlaneseq
      %v655 = vshrl.u32 %v654, 7
      %v656 = vsub.s32 1, %v655
      %v657 = vrot.slane %v648, %v656
      %v660 = vadd.f32 %v640, %v653
      %v661 = vadd.f32 %v641, %v657
      %v662 = vadd.f32 %v642, %v653
      %v663 = vadd.f32 %v643, %v657
      %v664 = vadd.f32 %v644, %v653
      %v665 = vadd.f32 %v645, %v657
      %v666 = vadd.f32 %v646, %v653
      %v667 = vadd.f32 %v647, %v657
      %v668 = vmax.f32 %v660, 0.0
      %v669 = vmax.f32 %v661, 0.0
      %v670 = vmax.f32 %v662, 0.0
      %v671 = vmax.f32 %v663, 0.0
      %v672 = vmax.f32 %v664, 0.0
      %v673 = vmax.f32 %v665, 0.0
      %v674 = vmax.f32 %v666, 0.0
      %v675 = vmax.f32 %v667, 0.0
      %v676 = vpack.c.bf16 %v668, %v668
      %v677 = vpack.c.bf16 %v669, %v669
      %v678 = vpack.c.bf16 %v670, %v670
      %v679 = vpack.c.bf16 %v671, %v671
      %v680 = vpack.c.bf16 %v672, %v672
      %v681 = vpack.c.bf16 %v673, %v673
      %v682 = vpack.c.bf16 %v674, %v674
      %v683 = vpack.c.bf16 %v675, %v675
      %v692 = vunpack.c.l.b16 %v676
      %v693 = vunpack.c.l.b16 %v677
      %v694 = vunpack.c.l.b16 %v678
      %v695 = vunpack.c.l.b16 %v679
      %v696 = vunpack.c.l.b16 %v680
      %v697 = vunpack.c.l.b16 %v681
      %v698 = vunpack.c.l.b16 %v682
      %v699 = vunpack.c.l.b16 %v683
      %v700 = vpack.c.b16 %v693, %v692
      %v701 = vpack.c.b16 %v695, %v694
      %v702 = vpack.c.b16 %v697, %v696
      %v703 = vpack.c.b16 %v699, %v698
      %v705 = vshrl.u32 %v700, 16
      %v707 = vrot.slane %v705, 7
      %v708 = vshll.u32 %v700, 16
      %v710 = vor.u32 %v707, %v708
      %v711 = vrot.slane %v707, 4
      %v713 = vshrl.u32 %v701, 16
      %v715 = vrot.slane %v713, 7
      %v716 = vshll.u32 %v701, 16
      %v718 = vor.u32 %v715, %v716
      %v719 = vrot.slane %v715, 4
      %v721 = vshrl.u32 %v702, 16
      %v723 = vrot.slane %v721, 7
      %v724 = vshll.u32 %v702, 16
      %v726 = vor.u32 %v723, %v724
      %v727 = vrot.slane %v723, 4
      %v729 = vshrl.u32 %v703, 16
      %v731 = vrot.slane %v729, 7
      %v732 = vshll.u32 %v703, 16
      %v734 = vor.u32 %v731, %v732
      %v735 = vrot.slane %v731, 4
      %vm744 = vcmask 1043456
      %vm745 = vmand %vm744, %vm251
      %vm746 = vcmask 1047556
      %vm747 = vmand %vm746, %vm253
      %vm748 = vmor %vm747, %vm745
      %v749 = vld [vmem:[#allocation2] sm:$0xff]
      %v750 = vsel %vm748, %v710, %v749
      %751 = vst [vmem:[#allocation2] sm:$0xff] %v750
      %v752 = vld [vmem:[#allocation2 + $0x8] sm:$0x11]
      %v753 = vsel %vm238, %v711, %v752
      %754 = vst [vmem:[#allocation2 + $0x8] sm:$0x11] %v753
      %v755 = vld [vmem:[#allocation2 + $0x10] sm:$0xff]
      %v756 = vsel %vm748, %v718, %v755
      %757 = vst [vmem:[#allocation2 + $0x10] sm:$0xff] %v756
      %v758 = vld [vmem:[#allocation2 + $0x18] sm:$0x11]
      %v759 = vsel %vm238, %v719, %v758
      %760 = vst [vmem:[#allocation2 + $0x18] sm:$0x11] %v759
      %v761 = vld [vmem:[#allocation2 + $0x20] sm:$0xff]
      %v762 = vsel %vm748, %v726, %v761
      %763 = vst [vmem:[#allocation2 + $0x20] sm:$0xff] %v762
      %v764 = vld [vmem:[#allocation2 + $0x28] sm:$0x11]
      %v765 = vsel %vm238, %v727, %v764
      %766 = vst [vmem:[#allocation2 + $0x28] sm:$0x11] %v765
      %v767 = vld [vmem:[#allocation2 + $0x30] sm:$0xff]
      %v768 = vsel %vm748, %v734, %v767
      %769 = vst [vmem:[#allocation2 + $0x30] sm:$0xff] %v768
      %v770 = vld [vmem:[#allocation2 + $0x38] sm:$0x11]
      %v771 = vsel %vm238, %v735, %v770
      %772 = vst [vmem:[#allocation2 + $0x38] sm:$0x11] %v771
      %v773 = vld [vmem:[#allocation2] sm:$0xff]
      %v774 = vld [vmem:[#allocation2 + $0x10] sm:$0xff]
      %v775 = vld [vmem:[#allocation2 + $0x20] sm:$0xff]
      %v776 = vld [vmem:[#allocation2 + $0x30] sm:$0xff]
      %v777 = vld [vmem:[%s2] sm:$0xff]
      %v778 = vld [vmem:[%s2 + $0x8] sm:$0xff]
      %v779 = vld [vmem:[%s2 + $0x10] sm:$0xff]
      %v780 = vld [vmem:[%s2 + $0x18] sm:$0xff]
      %v781 = vld [vmem:[%s2 + $0x20] sm:$0xff]
      %v782 = vld [vmem:[%s2 + $0x28] sm:$0xff]
      %v783 = vld [vmem:[%s2 + $0x30] sm:$0xff]
      %v784 = vld [vmem:[%s2 + $0x38] sm:$0xff]
      %v785 = vld [vmem:[%s2 + $0x40] sm:$0xff]
      %v786 = vld [vmem:[%s2 + $0x48] sm:$0xff]
      %v787 = vld [vmem:[%s2 + $0x50] sm:$0xff]
      %v788 = vld [vmem:[%s2 + $0x58] sm:$0xff]
      %v789 = vld [vmem:[%s2 + $0x60] sm:$0xff]
      %v790 = vld [vmem:[%s2 + $0x68] sm:$0xff]
      %v791 = vld [vmem:[%s2 + $0x70] sm:$0xff]
      %v792 = vld [vmem:[%s2 + $0x78] sm:$0xff]
      %v793 = vld [vmem:[%s2 + $0x80] sm:$0xff]
      %v794 = vld [vmem:[%s2 + $0x88] sm:$0xff]
      %v795 = vld [vmem:[%s2 + $0x90] sm:$0xff]
      %v796 = vld [vmem:[%s2 + $0x98] sm:$0xff]
      %v797 = vld [vmem:[%s2 + $0xa0] sm:$0xff]
      %v798 = vld [vmem:[%s2 + $0xa8] sm:$0xff]
      %v799 = vld [vmem:[%s2 + $0xb0] sm:$0xff]
      %v800 = vld [vmem:[%s2 + $0xb8] sm:$0xff]
      %v801 = vld [vmem:[%s2 + $0xc0] sm:$0xff]
      %v802 = vld [vmem:[%s2 + $0xc8] sm:$0xff]
      %v803 = vld [vmem:[%s2 + $0xd0] sm:$0xff]
      %v804 = vld [vmem:[%s2 + $0xd8] sm:$0xff]
      %v805 = vld [vmem:[%s2 + $0xe0] sm:$0xff]
      %v806 = vld [vmem:[%s2 + $0xe8] sm:$0xff]
      %v807 = vld [vmem:[%s2 + $0xf0] sm:$0xff]
      %v808 = vld [vmem:[%s2 + $0xf8] sm:$0xff]
      %v809 = vld [vmem:[#allocation2 + $0x8] sm:$0x11]
      %v810 = vld [vmem:[#allocation2 + $0x18] sm:$0x11]
      %v811 = vld [vmem:[#allocation2 + $0x28] sm:$0x11]
      %v812 = vld [vmem:[#allocation2 + $0x38] sm:$0x11]
      %v814 = vshrl.u32 %v773, 16
      %v816 = vrot.slane %v814, 4
      %v817 = vshll.u32 %v773, 16
      %v819 = vrot.slane %v817, 5
      %v820 = vor.u32 %v816, %v819
      %v821 = vrot.slane %v820, 4
      %v823 = vshll.u32 %v809, 16
      %v825 = vrot.slane %v823, 5
      %v826 = vsel %vm282, %v821, %v825
      %v828 = vshrl.u32 %v774, 16
      %v830 = vrot.slane %v828, 4
      %v831 = vshll.u32 %v774, 16
      %v833 = vrot.slane %v831, 5
      %v834 = vor.u32 %v830, %v833
      %v835 = vrot.slane %v834, 4
      %v837 = vshll.u32 %v810, 16
      %v839 = vrot.slane %v837, 5
      %v840 = vsel %vm282, %v835, %v839
      %v842 = vshrl.u32 %v775, 16
      %v844 = vrot.slane %v842, 4
      %v845 = vshll.u32 %v775, 16
      %v847 = vrot.slane %v845, 5
      %v848 = vor.u32 %v844, %v847
      %v849 = vrot.slane %v848, 4
      %v851 = vshll.u32 %v811, 16
      %v853 = vrot.slane %v851, 5
      %v854 = vsel %vm282, %v849, %v853
      %v856 = vshrl.u32 %v776, 16
      %v858 = vrot.slane %v856, 4
      %v859 = vshll.u32 %v776, 16
      %v861 = vrot.slane %v859, 5
      %v862 = vor.u32 %v858, %v861
      %v863 = vrot.slane %v862, 4
      %v865 = vshll.u32 %v812, 16
      %v867 = vrot.slane %v865, 5
      %v868 = vsel %vm282, %v863, %v867
      %s869 = scalar_lea.vmem %s2, 256
      %v870 = vld [vmem:[%s869] sm:$0xff]
      %v871 = vld [vmem:[%s869 + $0x8] sm:$0xff]
      %v872 = vld [vmem:[%s869 + $0x10] sm:$0xff]
      %v873 = vld [vmem:[%s869 + $0x18] sm:$0xff]
      %v874 = vld [vmem:[%s869 + $0x20] sm:$0xff]
      %v875 = vld [vmem:[%s869 + $0x28] sm:$0xff]
      %v876 = vld [vmem:[%s869 + $0x30] sm:$0xff]
      %v877 = vld [vmem:[%s869 + $0x38] sm:$0xff]
      %v878 = vld [vmem:[%s869 + $0x40] sm:$0xff]
      %v879 = vld [vmem:[%s869 + $0x48] sm:$0xff]
      %v880 = vld [vmem:[%s869 + $0x50] sm:$0xff]
      %v881 = vld [vmem:[%s869 + $0x58] sm:$0xff]
      %v882 = vld [vmem:[%s869 + $0x60] sm:$0xff]
      %v883 = vld [vmem:[%s869 + $0x68] sm:$0xff]
      %v884 = vld [vmem:[%s869 + $0x70] sm:$0xff]
      %v885 = vld [vmem:[%s869 + $0x78] sm:$0xff]
      %v886 = vld [vmem:[%s869 + $0x80] sm:$0xff]
      %v887 = vld [vmem:[%s869 + $0x88] sm:$0xff]
      %v888 = vld [vmem:[%s869 + $0x90] sm:$0xff]
      %v889 = vld [vmem:[%s869 + $0x98] sm:$0xff]
      %v890 = vld [vmem:[%s869 + $0xa0] sm:$0xff]
      %v891 = vld [vmem:[%s869 + $0xa8] sm:$0xff]
      %v892 = vld [vmem:[%s869 + $0xb0] sm:$0xff]
      %v893 = vld [vmem:[%s869 + $0xb8] sm:$0xff]
      %v894 = vld [vmem:[%s869 + $0xc0] sm:$0xff]
      %v895 = vld [vmem:[%s869 + $0xc8] sm:$0xff]
      %v896 = vld [vmem:[%s869 + $0xd0] sm:$0xff]
      %v897 = vld [vmem:[%s869 + $0xd8] sm:$0xff]
      %v898 = vld [vmem:[%s869 + $0xe0] sm:$0xff]
      %v899 = vld [vmem:[%s869 + $0xe8] sm:$0xff]
      %v900 = vld [vmem:[%s869 + $0xf0] sm:$0xff]
      %v901 = vld [vmem:[%s869 + $0xf8] sm:$0xff]
      %v902 = vunpack.c.l.b16 %v826
      %v903 = vunpack.c.h.b16 %v826
      %v904 = vunpack.c.l.b16 %v840
      %v905 = vunpack.c.h.b16 %v840
      %v906 = vunpack.c.l.b16 %v854
      %v907 = vunpack.c.h.b16 %v854
      %v908 = vunpack.c.l.b16 %v868
      %v909 = vunpack.c.h.b16 %v868
      %v910 = vpack.c.b16 %v904, %v902
      %v911 = vpack.c.b16 %v905, %v903
      %v912 = vpack.c.b16 %v908, %v906
      %v913 = vpack.c.b16 %v909, %v907
      %v950 = vunpack.c.l.b16 %v870
      %v951 = vunpack.c.h.b16 %v870
      %v952 = vunpack.c.l.b16 %v871
      %v953 = vunpack.c.h.b16 %v871
      %v954 = vunpack.c.l.b16 %v872
      %v955 = vunpack.c.h.b16 %v872
      %v956 = vunpack.c.l.b16 %v873
      %v957 = vunpack.c.h.b16 %v873
      %v958 = vunpack.c.l.b16 %v874
      %v959 = vunpack.c.h.b16 %v874
      %v960 = vunpack.c.l.b16 %v875
      %v961 = vunpack.c.h.b16 %v875
      %v962 = vunpack.c.l.b16 %v876
      %v963 = vunpack.c.h.b16 %v876
      %v964 = vunpack.c.l.b16 %v877
      %v965 = vunpack.c.h.b16 %v877
      %v966 = vunpack.c.l.b16 %v878
      %v967 = vunpack.c.h.b16 %v878
      %v968 = vunpack.c.l.b16 %v879
      %v969 = vunpack.c.h.b16 %v879
      %v970 = vunpack.c.l.b16 %v880
      %v971 = vunpack.c.h.b16 %v880
      %v972 = vunpack.c.l.b16 %v881
      %v973 = vunpack.c.h.b16 %v881
      %v974 = vunpack.c.l.b16 %v882
      %v975 = vunpack.c.h.b16 %v882
      %v976 = vunpack.c.l.b16 %v883
      %v977 = vunpack.c.h.b16 %v883
      %v978 = vunpack.c.l.b16 %v884
      %v979 = vunpack.c.h.b16 %v884
      %v980 = vunpack.c.l.b16 %v885
      %v981 = vunpack.c.h.b16 %v885
      %v982 = vunpack.c.l.b16 %v886
      %v983 = vunpack.c.h.b16 %v886
      %v984 = vunpack.c.l.b16 %v887
      %v985 = vunpack.c.h.b16 %v887
      %v986 = vunpack.c.l.b16 %v888
      %v987 = vunpack.c.h.b16 %v888
      %v988 = vunpack.c.l.b16 %v889
      %v989 = vunpack.c.h.b16 %v889
      %v990 = vunpack.c.l.b16 %v890
      %v991 = vunpack.c.h.b16 %v890
      %v992 = vunpack.c.l.b16 %v891
      %v993 = vunpack.c.h.b16 %v891
      %v994 = vunpack.c.l.b16 %v892
      %v995 = vunpack.c.h.b16 %v892
      %v996 = vunpack.c.l.b16 %v893
      %v997 = vunpack.c.h.b16 %v893
      %v998 = vunpack.c.l.b16 %v894
      %v999 = vunpack.c.h.b16 %v894
      %v1000 = vunpack.c.l.b16 %v895
      %v1001 = vunpack.c.h.b16 %v895
      %v1002 = vunpack.c.l.b16 %v896
      %v1003 = vunpack.c.h.b16 %v896
      %v1004 = vunpack.c.l.b16 %v897
      %v1005 = vunpack.c.h.b16 %v897
      %v1006 = vunpack.c.l.b16 %v898
      %v1007 = vunpack.c.h.b16 %v898
      %v1008 = vunpack.c.l.b16 %v899
      %v1009 = vunpack.c.h.b16 %v899
      %v1010 = vunpack.c.l.b16 %v900
      %v1011 = vunpack.c.h.b16 %v900
      %v1012 = vunpack.c.l.b16 %v901
      %v1013 = vunpack.c.h.b16 %v901
      %v1014 = vpack.c.b16 %v952, %v950
      %v1015 = vpack.c.b16 %v953, %v951
      %v1016 = vpack.c.b16 %v956, %v954
      %v1017 = vpack.c.b16 %v957, %v955
      %v1018 = vpack.c.b16 %v960, %v958
      %v1019 = vpack.c.b16 %v961, %v959
      %v1020 = vpack.c.b16 %v964, %v962
      %v1021 = vpack.c.b16 %v965, %v963
      %v1022 = vpack.c.b16 %v968, %v966
      %v1023 = vpack.c.b16 %v969, %v967
      %v1024 = vpack.c.b16 %v972, %v970
      %v1025 = vpack.c.b16 %v973, %v971
      %v1026 = vpack.c.b16 %v976, %v974
      %v1027 = vpack.c.b16 %v977, %v975
      %v1028 = vpack.c.b16 %v980, %v978
      %v1029 = vpack.c.b16 %v981, %v979
      %v1030 = vpack.c.b16 %v984, %v982
      %v1031 = vpack.c.b16 %v985, %v983
      %v1032 = vpack.c.b16 %v988, %v986
      %v1033 = vpack.c.b16 %v989, %v987
      %v1034 = vpack.c.b16 %v992, %v990
      %v1035 = vpack.c.b16 %v993, %v991
      %v1036 = vpack.c.b16 %v996, %v994
      %v1037 = vpack.c.b16 %v997, %v995
      %v1038 = vpack.c.b16 %v1000, %v998
      %v1039 = vpack.c.b16 %v1001, %v999
      %v1040 = vpack.c.b16 %v1004, %v1002
      %v1041 = vpack.c.b16 %v1005, %v1003
      %v1042 = vpack.c.b16 %v1008, %v1006
      %v1043 = vpack.c.b16 %v1009, %v1007
      %v1044 = vpack.c.b16 %v1012, %v1010
      %v1045 = vpack.c.b16 %v1013, %v1011
      %1078 = vmatprep.subr.bf16.mxu0 %v1015
      %1079 = vmatpush1.bf16.msra.mxu0 %v1014
      %1080 = vmatprep.subr.bf16.mxu0 %v1017
      %1081 = vmatpush1.bf16.msra.mxu0 %v1016
      %1082 = vmatprep.subr.bf16.mxu0 %v1019
      %1083 = vmatpush1.bf16.msra.mxu0 %v1018
      %1084 = vmatprep.subr.bf16.mxu0 %v1021
      %1085 = vmatpush1.bf16.msra.mxu0 %v1020
      %1086 = vmatprep.subr.bf16.mxu0 %v1023
      %1087 = vmatpush1.bf16.msra.mxu0 %v1022
      %1088 = vmatprep.subr.bf16.mxu0 %v1025
      %1089 = vmatpush1.bf16.msra.mxu0 %v1024
      %1090 = vmatprep.subr.bf16.mxu0 %v1027
      %1091 = vmatpush1.bf16.msra.mxu0 %v1026
      %1092 = vmatprep.subr.bf16.mxu0 %v1029
      %1093 = vmatpush1.bf16.msra.mxu0 %v1028
      %1094 = vmatprep.subr.bf16.mxu0 %v1031
      %1095 = vmatpush1.bf16.msra.mxu0 %v1030
      %1096 = vmatprep.subr.bf16.mxu0 %v1033
      %1097 = vmatpush1.bf16.msra.mxu0 %v1032
      %1098 = vmatprep.subr.bf16.mxu0 %v1035
      %1099 = vmatpush1.bf16.msra.mxu0 %v1034
      %1100 = vmatprep.subr.bf16.mxu0 %v1037
      %1101 = vmatpush1.bf16.msra.mxu0 %v1036
      %1102 = vmatprep.subr.bf16.mxu0 %v1039
      %1103 = vmatpush1.bf16.msra.mxu0 %v1038
      %1104 = vmatprep.subr.bf16.mxu0 %v1041
      %1105 = vmatpush1.bf16.msra.mxu0 %v1040
      %1106 = vmatprep.subr.bf16.mxu0 %v1043
      %1107 = vmatpush1.bf16.msra.mxu0 %v1042
      %1108 = vmatprep.subr.bf16.mxu0 %v1045
      %1109 = vmatpush1.bf16.msra.mxu0 %v1044
      %1110 = vmatprep.mubr.bf16.mxu0 %v911
      %1111 = vmatmul.mubr.bf16.gmra.mrb[0].mxu0 %v910
      %v1112 = vpop.f32.mrb[0].mxu0
      %v1113 = vadd.f32 0.0, %v1112
      %v1114 = vpop.f32.mrb[0].mxu0
      %v1115 = vadd.f32 0.0, %v1114
      %v1116 = vpop.f32.mrb[0].mxu0
      %v1117 = vadd.f32 0.0, %v1116
      %v1118 = vpop.f32.mrb[0].mxu0
      %v1119 = vadd.f32 0.0, %v1118
      %1120 = vmatprep.mubr.bf16.mxu0 %v913
      %1121 = vmatmul.mubr.bf16.gmra.mrb[0].mxu0 %v912
      %v1122 = vpop.f32.mrb[0].mxu0
      %v1123 = vadd.f32 0.0, %v1122
      %v1124 = vpop.f32.mrb[0].mxu0
      %v1125 = vadd.f32 0.0, %v1124
      %v1126 = vpop.f32.mrb[0].mxu0
      %v1127 = vadd.f32 0.0, %v1126
      %v1128 = vpop.f32.mrb[0].mxu0
      %v1129 = vadd.f32 0.0, %v1128
      %1130 = vdwg.mxu0
      %v1135 = vunpack.c.l.b16 %v773
      %v1136 = vunpack.c.h.b16 %v773
      %v1137 = vunpack.c.l.b16 %v774
      %v1138 = vunpack.c.h.b16 %v774
      %v1139 = vunpack.c.l.b16 %v775
      %v1140 = vunpack.c.h.b16 %v775
      %v1141 = vunpack.c.l.b16 %v776
      %v1142 = vunpack.c.h.b16 %v776
      %v1143 = vpack.c.b16 %v1137, %v1135
      %v1144 = vpack.c.b16 %v1138, %v1136
      %v1145 = vpack.c.b16 %v1141, %v1139
      %v1146 = vpack.c.b16 %v1142, %v1140
      %v1183 = vunpack.c.l.b16 %v777
      %v1184 = vunpack.c.h.b16 %v777
      %v1185 = vunpack.c.l.b16 %v778
      %v1186 = vunpack.c.h.b16 %v778
      %v1187 = vunpack.c.l.b16 %v779
      %v1188 = vunpack.c.h.b16 %v779
      %v1189 = vunpack.c.l.b16 %v780
      %v1190 = vunpack.c.h.b16 %v780
      %v1191 = vunpack.c.l.b16 %v781
      %v1192 = vunpack.c.h.b16 %v781
      %v1193 = vunpack.c.l.b16 %v782
      %v1194 = vunpack.c.h.b16 %v782
      %v1195 = vunpack.c.l.b16 %v783
      %v1196 = vunpack.c.h.b16 %v783
      %v1197 = vunpack.c.l.b16 %v784
      %v1198 = vunpack.c.h.b16 %v784
      %v1199 = vunpack.c.l.b16 %v785
      %v1200 = vunpack.c.h.b16 %v785
      %v1201 = vunpack.c.l.b16 %v786
      %v1202 = vunpack.c.h.b16 %v786
      %v1203 = vunpack.c.l.b16 %v787
      %v1204 = vunpack.c.h.b16 %v787
      %v1205 = vunpack.c.l.b16 %v788
      %v1206 = vunpack.c.h.b16 %v788
      %v1207 = vunpack.c.l.b16 %v789
      %v1208 = vunpack.c.h.b16 %v789
      %v1209 = vunpack.c.l.b16 %v790
      %v1210 = vunpack.c.h.b16 %v790
      %v1211 = vunpack.c.l.b16 %v791
      %v1212 = vunpack.c.h.b16 %v791
      %v1213 = vunpack.c.l.b16 %v792
      %v1214 = vunpack.c.h.b16 %v792
      %v1215 = vunpack.c.l.b16 %v793
      %v1216 = vunpack.c.h.b16 %v793
      %v1217 = vunpack.c.l.b16 %v794
      %v1218 = vunpack.c.h.b16 %v794
      %v1219 = vunpack.c.l.b16 %v795
      %v1220 = vunpack.c.h.b16 %v795
      %v1221 = vunpack.c.l.b16 %v796
      %v1222 = vunpack.c.h.b16 %v796
      %v1223 = vunpack.c.l.b16 %v797
      %v1224 = vunpack.c.h.b16 %v797
      %v1225 = vunpack.c.l.b16 %v798
      %v1226 = vunpack.c.h.b16 %v798
      %v1227 = vunpack.c.l.b16 %v799
      %v1228 = vunpack.c.h.b16 %v799
      %v1229 = vunpack.c.l.b16 %v800
      %v1230 = vunpack.c.h.b16 %v800
      %v1231 = vunpack.c.l.b16 %v801
      %v1232 = vunpack.c.h.b16 %v801
      %v1233 = vunpack.c.l.b16 %v802
      %v1234 = vunpack.c.h.b16 %v802
      %v1235 = vunpack.c.l.b16 %v803
      %v1236 = vunpack.c.h.b16 %v803
      %v1237 = vunpack.c.l.b16 %v804
      %v1238 = vunpack.c.h.b16 %v804
      %v1239 = vunpack.c.l.b16 %v805
      %v1240 = vunpack.c.h.b16 %v805
      %v1241 = vunpack.c.l.b16 %v806
      %v1242 = vunpack.c.h.b16 %v806
      %v1243 = vunpack.c.l.b16 %v807
      %v1244 = vunpack.c.h.b16 %v807
      %v1245 = vunpack.c.l.b16 %v808
      %v1246 = vunpack.c.h.b16 %v808
      %v1247 = vpack.c.b16 %v1185, %v1183
      %v1248 = vpack.c.b16 %v1186, %v1184
      %v1249 = vpack.c.b16 %v1189, %v1187
      %v1250 = vpack.c.b16 %v1190, %v1188
      %v1251 = vpack.c.b16 %v1193, %v1191
      %v1252 = vpack.c.b16 %v1194, %v1192
      %v1253 = vpack.c.b16 %v1197, %v1195
      %v1254 = vpack.c.b16 %v1198, %v1196
      %v1255 = vpack.c.b16 %v1201, %v1199
      %v1256 = vpack.c.b16 %v1202, %v1200
      %v1257 = vpack.c.b16 %v1205, %v1203
      %v1258 = vpack.c.b16 %v1206, %v1204
      %v1259 = vpack.c.b16 %v1209, %v1207
      %v1260 = vpack.c.b16 %v1210, %v1208
      %v1261 = vpack.c.b16 %v1213, %v1211
      %v1262 = vpack.c.b16 %v1214, %v1212
      %v1263 = vpack.c.b16 %v1217, %v1215
      %v1264 = vpack.c.b16 %v1218, %v1216
      %v1265 = vpack.c.b16 %v1221, %v1219
      %v1266 = vpack.c.b16 %v1222, %v1220
      %v1267 = vpack.c.b16 %v1225, %v1223
      %v1268 = vpack.c.b16 %v1226, %v1224
      %v1269 = vpack.c.b16 %v1229, %v1227
      %v1270 = vpack.c.b16 %v1230, %v1228
      %v1271 = vpack.c.b16 %v1233, %v1231
      %v1272 = vpack.c.b16 %v1234, %v1232
      %v1273 = vpack.c.b16 %v1237, %v1235
      %v1274 = vpack.c.b16 %v1238, %v1236
      %v1275 = vpack.c.b16 %v1241, %v1239
      %v1276 = vpack.c.b16 %v1242, %v1240
      %v1277 = vpack.c.b16 %v1245, %v1243
      %v1278 = vpack.c.b16 %v1246, %v1244
      %1311 = vmatprep.subr.bf16.mxu0 %v1248
      %1312 = vmatpush1.bf16.msra.mxu0 %v1247
      %1313 = vmatprep.subr.bf16.mxu0 %v1250
      %1314 = vmatpush1.bf16.msra.mxu0 %v1249
      %1315 = vmatprep.subr.bf16.mxu0 %v1252
      %1316 = vmatpush1.bf16.msra.mxu0 %v1251
      %1317 = vmatprep.subr.bf16.mxu0 %v1254
      %1318 = vmatpush1.bf16.msra.mxu0 %v1253
      %1319 = vmatprep.subr.bf16.mxu0 %v1256
      %1320 = vmatpush1.bf16.msra.mxu0 %v1255
      %1321 = vmatprep.subr.bf16.mxu0 %v1258
      %1322 = vmatpush1.bf16.msra.mxu0 %v1257
      %1323 = vmatprep.subr.bf16.mxu0 %v1260
      %1324 = vmatpush1.bf16.msra.mxu0 %v1259
      %1325 = vmatprep.subr.bf16.mxu0 %v1262
      %1326 = vmatpush1.bf16.msra.mxu0 %v1261
      %1327 = vmatprep.subr.bf16.mxu0 %v1264
      %1328 = vmatpush1.bf16.msra.mxu0 %v1263
      %1329 = vmatprep.subr.bf16.mxu0 %v1266
      %1330 = vmatpush1.bf16.msra.mxu0 %v1265
      %1331 = vmatprep.subr.bf16.mxu0 %v1268
      %1332 = vmatpush1.bf16.msra.mxu0 %v1267
      %1333 = vmatprep.subr.bf16.mxu0 %v1270
      %1334 = vmatpush1.bf16.msra.mxu0 %v1269
      %1335 = vmatprep.subr.bf16.mxu0 %v1272
      %1336 = vmatpush1.bf16.msra.mxu0 %v1271
      %1337 = vmatprep.subr.bf16.mxu0 %v1274
      %1338 = vmatpush1.bf16.msra.mxu0 %v1273
      %1339 = vmatprep.subr.bf16.mxu0 %v1276
      %1340 = vmatpush1.bf16.msra.mxu0 %v1275
      %1341 = vmatprep.subr.bf16.mxu0 %v1278
      %1342 = vmatpush1.bf16.msra.mxu0 %v1277
      %1343 = vmatprep.mubr.bf16.mxu0 %v1144
      %1344 = vmatmul.mubr.bf16.gmra.mrb[0].mxu0 %v1143
      %v1345 = vpop.f32.mrb[0].mxu0
      %v1346 = vadd.f32 %v1113, %v1345
      %v1347 = vpop.f32.mrb[0].mxu0
      %v1348 = vadd.f32 %v1115, %v1347
      %v1349 = vpop.f32.mrb[0].mxu0
      %v1350 = vadd.f32 %v1117, %v1349
      %v1351 = vpop.f32.mrb[0].mxu0
      %v1352 = vadd.f32 %v1119, %v1351
      %1353 = vmatprep.mubr.bf16.mxu0 %v1146
      %1354 = vmatmul.mubr.bf16.gmra.mrb[0].mxu0 %v1145
      %v1355 = vpop.f32.mrb[0].mxu0
      %v1356 = vadd.f32 %v1123, %v1355
      %v1357 = vpop.f32.mrb[0].mxu0
      %v1358 = vadd.f32 %v1125, %v1357
      %v1359 = vpop.f32.mrb[0].mxu0
      %v1360 = vadd.f32 %v1127, %v1359
      %v1361 = vpop.f32.mrb[0].mxu0
      %v1362 = vadd.f32 %v1129, %v1361
      %1363 = vdwg.mxu0
      %v1364 = vld [vmem:[#allocation2] sm:$0xee]
      %v1365 = vld [vmem:[#allocation2 + $0x10] sm:$0xee]
      %v1366 = vld [vmem:[#allocation2 + $0x20] sm:$0xee]
      %v1367 = vld [vmem:[#allocation2 + $0x30] sm:$0xee]
      %v1376 = vrot.slane %v1364, 5
      %v1377 = vrot.slane %v1376, 4
      %v1378 = vrot.slane %v809, 5
      %v1379 = vsel %vm533, %v1377, %v1378
      %v1380 = vrot.slane %v1365, 5
      %v1381 = vrot.slane %v1380, 4
      %v1382 = vrot.slane %v810, 5
      %v1383 = vsel %vm533, %v1381, %v1382
      %v1384 = vrot.slane %v1366, 5
      %v1385 = vrot.slane %v1384, 4
      %v1386 = vrot.slane %v811, 5
      %v1387 = vsel %vm533, %v1385, %v1386
      %v1388 = vrot.slane %v1367, 5
      %v1389 = vrot.slane %v1388, 4
      %v1390 = vrot.slane %v812, 5
      %v1391 = vsel %vm533, %v1389, %v1390
      %s1392 = scalar_lea.vmem %s2, 512
      %v1393 = vld [vmem:[%s1392] sm:$0xff]
      %v1394 = vld [vmem:[%s1392 + $0x8] sm:$0xff]
      %v1395 = vld [vmem:[%s1392 + $0x10] sm:$0xff]
      %v1396 = vld [vmem:[%s1392 + $0x18] sm:$0xff]
      %v1397 = vld [vmem:[%s1392 + $0x20] sm:$0xff]
      %v1398 = vld [vmem:[%s1392 + $0x28] sm:$0xff]
      %v1399 = vld [vmem:[%s1392 + $0x30] sm:$0xff]
      %v1400 = vld [vmem:[%s1392 + $0x38] sm:$0xff]
      %v1401 = vld [vmem:[%s1392 + $0x40] sm:$0xff]
      %v1402 = vld [vmem:[%s1392 + $0x48] sm:$0xff]
      %v1403 = vld [vmem:[%s1392 + $0x50] sm:$0xff]
      %v1404 = vld [vmem:[%s1392 + $0x58] sm:$0xff]
      %v1405 = vld [vmem:[%s1392 + $0x60] sm:$0xff]
      %v1406 = vld [vmem:[%s1392 + $0x68] sm:$0xff]
      %v1407 = vld [vmem:[%s1392 + $0x70] sm:$0xff]
      %v1408 = vld [vmem:[%s1392 + $0x78] sm:$0xff]
      %v1409 = vld [vmem:[%s1392 + $0x80] sm:$0xff]
      %v1410 = vld [vmem:[%s1392 + $0x88] sm:$0xff]
      %v1411 = vld [vmem:[%s1392 + $0x90] sm:$0xff]
      %v1412 = vld [vmem:[%s1392 + $0x98] sm:$0xff]
      %v1413 = vld [vmem:[%s1392 + $0xa0] sm:$0xff]
      %v1414 = vld [vmem:[%s1392 + $0xa8] sm:$0xff]
      %v1415 = vld [vmem:[%s1392 + $0xb0] sm:$0xff]
      %v1416 = vld [vmem:[%s1392 + $0xb8] sm:$0xff]
      %v1417 = vld [vmem:[%s1392 + $0xc0] sm:$0xff]
      %v1418 = vld [vmem:[%s1392 + $0xc8] sm:$0xff]
      %v1419 = vld [vmem:[%s1392 + $0xd0] sm:$0xff]
      %v1420 = vld [vmem:[%s1392 + $0xd8] sm:$0xff]
      %v1421 = vld [vmem:[%s1392 + $0xe0] sm:$0xff]
      %v1422 = vld [vmem:[%s1392 + $0xe8] sm:$0xff]
      %v1423 = vld [vmem:[%s1392 + $0xf0] sm:$0xff]
      %v1424 = vld [vmem:[%s1392 + $0xf8] sm:$0xff]
      %v1425 = vunpack.c.l.b16 %v1379
      %v1426 = vunpack.c.h.b16 %v1379
      %v1427 = vunpack.c.l.b16 %v1383
      %v1428 = vunpack.c.h.b16 %v1383
      %v1429 = vunpack.c.l.b16 %v1387
      %v1430 = vunpack.c.h.b16 %v1387
      %v1431 = vunpack.c.l.b16 %v1391
      %v1432 = vunpack.c.h.b16 %v1391
      %v1433 = vpack.c.b16 %v1427, %v1425
      %v1434 = vpack.c.b16 %v1428, %v1426
      %v1435 = vpack.c.b16 %v1431, %v1429
      %v1436 = vpack.c.b16 %v1432, %v1430
      %v1473 = vunpack.c.l.b16 %v1393
      %v1474 = vunpack.c.h.b16 %v1393
      %v1475 = vunpack.c.l.b16 %v1394
      %v1476 = vunpack.c.h.b16 %v1394
      %v1477 = vunpack.c.l.b16 %v1395
      %v1478 = vunpack.c.h.b16 %v1395
      %v1479 = vunpack.c.l.b16 %v1396
      %v1480 = vunpack.c.h.b16 %v1396
      %v1481 = vunpack.c.l.b16 %v1397
      %v1482 = vunpack.c.h.b16 %v1397
      %v1483 = vunpack.c.l.b16 %v1398
      %v1484 = vunpack.c.h.b16 %v1398
      %v1485 = vunpack.c.l.b16 %v1399
      %v1486 = vunpack.c.h.b16 %v1399
      %v1487 = vunpack.c.l.b16 %v1400
      %v1488 = vunpack.c.h.b16 %v1400
      %v1489 = vunpack.c.l.b16 %v1401
      %v1490 = vunpack.c.h.b16 %v1401
      %v1491 = vunpack.c.l.b16 %v1402
      %v1492 = vunpack.c.h.b16 %v1402
      %v1493 = vunpack.c.l.b16 %v1403
      %v1494 = vunpack.c.h.b16 %v1403
      %v1495 = vunpack.c.l.b16 %v1404
      %v1496 = vunpack.c.h.b16 %v1404
      %v1497 = vunpack.c.l.b16 %v1405
      %v1498 = vunpack.c.h.b16 %v1405
      %v1499 = vunpack.c.l.b16 %v1406
      %v1500 = vunpack.c.h.b16 %v1406
      %v1501 = vunpack.c.l.b16 %v1407
      %v1502 = vunpack.c.h.b16 %v1407
      %v1503 = vunpack.c.l.b16 %v1408
      %v1504 = vunpack.c.h.b16 %v1408
      %v1505 = vunpack.c.l.b16 %v1409
      %v1506 = vunpack.c.h.b16 %v1409
      %v1507 = vunpack.c.l.b16 %v1410
      %v1508 = vunpack.c.h.b16 %v1410
      %v1509 = vunpack.c.l.b16 %v1411
      %v1510 = vunpack.c.h.b16 %v1411
      %v1511 = vunpack.c.l.b16 %v1412
      %v1512 = vunpack.c.h.b16 %v1412
      %v1513 = vunpack.c.l.b16 %v1413
      %v1514 = vunpack.c.h.b16 %v1413
      %v1515 = vunpack.c.l.b16 %v1414
      %v1516 = vunpack.c.h.b16 %v1414
      %v1517 = vunpack.c.l.b16 %v1415
      %v1518 = vunpack.c.h.b16 %v1415
      %v1519 = vunpack.c.l.b16 %v1416
      %v1520 = vunpack.c.h.b16 %v1416
      %v1521 = vunpack.c.l.b16 %v1417
      %v1522 = vunpack.c.h.b16 %v1417
      %v1523 = vunpack.c.l.b16 %v1418
      %v1524 = vunpack.c.h.b16 %v1418
      %v1525 = vunpack.c.l.b16 %v1419
      %v1526 = vunpack.c.h.b16 %v1419
      %v1527 = vunpack.c.l.b16 %v1420
      %v1528 = vunpack.c.h.b16 %v1420
      %v1529 = vunpack.c.l.b16 %v1421
      %v1530 = vunpack.c.h.b16 %v1421
      %v1531 = vunpack.c.l.b16 %v1422
      %v1532 = vunpack.c.h.b16 %v1422
      %v1533 = vunpack.c.l.b16 %v1423
      %v1534 = vunpack.c.h.b16 %v1423
      %v1535 = vunpack.c.l.b16 %v1424
      %v1536 = vunpack.c.h.b16 %v1424
      %v1537 = vpack.c.b16 %v1475, %v1473
      %v1538 = vpack.c.b16 %v1476, %v1474
      %v1539 = vpack.c.b16 %v1479, %v1477
      %v1540 = vpack.c.b16 %v1480, %v1478
      %v1541 = vpack.c.b16 %v1483, %v1481
      %v1542 = vpack.c.b16 %v1484, %v1482
      %v1543 = vpack.c.b16 %v1487, %v1485
      %v1544 = vpack.c.b16 %v1488, %v1486
      %v1545 = vpack.c.b16 %v1491, %v1489
      %v1546 = vpack.c.b16 %v1492, %v1490
      %v1547 = vpack.c.b16 %v1495, %v1493
      %v1548 = vpack.c.b16 %v1496, %v1494
      %v1549 = vpack.c.b16 %v1499, %v1497
      %v1550 = vpack.c.b16 %v1500, %v1498
      %v1551 = vpack.c.b16 %v1503, %v1501
      %v1552 = vpack.c.b16 %v1504, %v1502
      %v1553 = vpack.c.b16 %v1507, %v1505
      %v1554 = vpack.c.b16 %v1508, %v1506
      %v1555 = vpack.c.b16 %v1511, %v1509
      %v1556 = vpack.c.b16 %v1512, %v1510
      %v1557 = vpack.c.b16 %v1515, %v1513
      %v1558 = vpack.c.b16 %v1516, %v1514
      %v1559 = vpack.c.b16 %v1519, %v1517
      %v1560 = vpack.c.b16 %v1520, %v1518
      %v1561 = vpack.c.b16 %v1523, %v1521
      %v1562 = vpack.c.b16 %v1524, %v1522
      %v1563 = vpack.c.b16 %v1527, %v1525
      %v1564 = vpack.c.b16 %v1528, %v1526
      %v1565 = vpack.c.b16 %v1531, %v1529
      %v1566 = vpack.c.b16 %v1532, %v1530
      %v1567 = vpack.c.b16 %v1535, %v1533
      %v1568 = vpack.c.b16 %v1536, %v1534
      %1601 = vmatprep.subr.bf16.mxu0 %v1538
      %1602 = vmatpush1.bf16.msra.mxu0 %v1537
      %1603 = vmatprep.subr.bf16.mxu0 %v1540
      %1604 = vmatpush1.bf16.msra.mxu0 %v1539
      %1605 = vmatprep.subr.bf16.mxu0 %v1542
      %1606 = vmatpush1.bf16.msra.mxu0 %v1541
      %1607 = vmatprep.subr.bf16.mxu0 %v1544
      %1608 = vmatpush1.bf16.msra.mxu0 %v1543
      %1609 = vmatprep.subr.bf16.mxu0 %v1546
      %1610 = vmatpush1.bf16.msra.mxu0 %v1545
      %1611 = vmatprep.subr.bf16.mxu0 %v1548
      %1612 = vmatpush1.bf16.msra.mxu0 %v1547
      %1613 = vmatprep.subr.bf16.mxu0 %v1550
      %1614 = vmatpush1.bf16.msra.mxu0 %v1549
      %1615 = vmatprep.subr.bf16.mxu0 %v1552
      %1616 = vmatpush1.bf16.msra.mxu0 %v1551
      %1617 = vmatprep.subr.bf16.mxu0 %v1554
      %1618 = vmatpush1.bf16.msra.mxu0 %v1553
      %1619 = vmatprep.subr.bf16.mxu0 %v1556
      %1620 = vmatpush1.bf16.msra.mxu0 %v1555
      %1621 = vmatprep.subr.bf16.mxu0 %v1558
      %1622 = vmatpush1.bf16.msra.mxu0 %v1557
      %1623 = vmatprep.subr.bf16.mxu0 %v1560
      %1624 = vmatpush1.bf16.msra.mxu0 %v1559
      %1625 = vmatprep.subr.bf16.mxu0 %v1562
      %1626 = vmatpush1.bf16.msra.mxu0 %v1561
      %1627 = vmatprep.subr.bf16.mxu0 %v1564
      %1628 = vmatpush1.bf16.msra.mxu0 %v1563
      %1629 = vmatprep.subr.bf16.mxu0 %v1566
      %1630 = vmatpush1.bf16.msra.mxu0 %v1565
      %1631 = vmatprep.subr.bf16.mxu0 %v1568
      %1632 = vmatpush1.bf16.msra.mxu0 %v1567
      %1633 = vmatprep.mubr.bf16.mxu0 %v1434
      %1634 = vmatmul.mubr.bf16.gmra.mrb[0].mxu0 %v1433
      %v1635 = vpop.f32.mrb[0].mxu0
      %v1636 = vadd.f32 0.0, %v1635
      %v1637 = vpop.f32.mrb[0].mxu0
      %v1638 = vadd.f32 0.0, %v1637
      %v1639 = vpop.f32.mrb[0].mxu0
      %v1640 = vadd.f32 0.0, %v1639
      %v1641 = vpop.f32.mrb[0].mxu0
      %v1642 = vadd.f32 0.0, %v1641
      %1643 = vmatprep.mubr.bf16.mxu0 %v1436
      %1644 = vmatmul.mubr.bf16.gmra.mrb[0].mxu0 %v1435
      %v1645 = vpop.f32.mrb[0].mxu0
      %v1646 = vadd.f32 0.0, %v1645
      %v1647 = vpop.f32.mrb[0].mxu0
      %v1648 = vadd.f32 0.0, %v1647
      %v1649 = vpop.f32.mrb[0].mxu0
      %v1650 = vadd.f32 0.0, %v1649
      %v1651 = vpop.f32.mrb[0].mxu0
      %v1652 = vadd.f32 0.0, %v1651
      %1653 = vdwg.mxu0
      %v1654 = vadd.f32 %v1346, %v1636
      %v1655 = vadd.f32 %v1348, %v1638
      %v1656 = vadd.f32 %v1350, %v1640
      %v1657 = vadd.f32 %v1352, %v1642
      %v1658 = vadd.f32 %v1356, %v1646
      %v1659 = vadd.f32 %v1358, %v1648
      %v1660 = vadd.f32 %v1360, %v1650
      %v1661 = vadd.f32 %v1362, %v1652
      %s1662 = scalar_lea.vmem %s4, 1
      %v1663 = vld [vmem:[%s1662] ss:$8 sm:$0x3]
      %v1665 = vlaneseq
      %v1666 = vshrl.u32 %v1665, 7
      %v1667 = vsub.s32 0, %v1666
      %v1668 = vrot.slane %v1663, %v1667
      %v1669 = vlaneseq
      %v1670 = vshrl.u32 %v1669, 7
      %v1671 = vsub.s32 1, %v1670
      %v1672 = vrot.slane %v1663, %v1671
      %v1675 = vadd.f32 %v1654, %v1668
      %v1676 = vadd.f32 %v1655, %v1672
      %v1677 = vadd.f32 %v1656, %v1668
      %v1678 = vadd.f32 %v1657, %v1672
      %v1679 = vadd.f32 %v1658, %v1668
      %v1680 = vadd.f32 %v1659, %v1672
      %v1681 = vadd.f32 %v1660, %v1668
      %v1682 = vadd.f32 %v1661, %v1672
      %v1683 = vmax.f32 %v1675, 0.0
      %v1684 = vmax.f32 %v1676, 0.0
      %v1685 = vmax.f32 %v1677, 0.0
      %v1686 = vmax.f32 %v1678, 0.0
      %v1687 = vmax.f32 %v1679, 0.0
      %v1688 = vmax.f32 %v1680, 0.0
      %v1689 = vmax.f32 %v1681, 0.0
      %v1690 = vmax.f32 %v1682, 0.0
      %v1691 = vpack.c.bf16 %v1683, %v1683
      %v1692 = vpack.c.bf16 %v1684, %v1684
      %v1693 = vpack.c.bf16 %v1685, %v1685
      %v1694 = vpack.c.bf16 %v1686, %v1686
      %v1695 = vpack.c.bf16 %v1687, %v1687
      %v1696 = vpack.c.bf16 %v1688, %v1688
      %v1697 = vpack.c.bf16 %v1689, %v1689
      %v1698 = vpack.c.bf16 %v1690, %v1690
      %v1707 = vunpack.c.l.b16 %v1691
      %v1708 = vunpack.c.l.b16 %v1692
      %v1709 = vunpack.c.l.b16 %v1693
      %v1710 = vunpack.c.l.b16 %v1694
      %v1711 = vunpack.c.l.b16 %v1695
      %v1712 = vunpack.c.l.b16 %v1696
      %v1713 = vunpack.c.l.b16 %v1697
      %v1714 = vunpack.c.l.b16 %v1698
      %v1715 = vpack.c.b16 %v1708, %v1707
      %v1716 = vpack.c.b16 %v1710, %v1709
      %v1717 = vpack.c.b16 %v1712, %v1711
      %v1718 = vpack.c.b16 %v1714, %v1713
      %v1720 = vshrl.u32 %v1715, 16
      %v1722 = vrot.slane %v1720, 7
      %v1723 = vshll.u32 %v1715, 16
      %v1725 = vor.u32 %v1722, %v1723
      %v1726 = vrot.slane %v1722, 4
      %v1728 = vshrl.u32 %v1716, 16
      %v1730 = vrot.slane %v1728, 7
      %v1731 = vshll.u32 %v1716, 16
      %v1733 = vor.u32 %v1730, %v1731
      %v1734 = vrot.slane %v1730, 4
      %v1736 = vshrl.u32 %v1717, 16
      %v1738 = vrot.slane %v1736, 7
      %v1739 = vshll.u32 %v1717, 16
      %v1741 = vor.u32 %v1738, %v1739
      %v1742 = vrot.slane %v1738, 4
      %v1744 = vshrl.u32 %v1718, 16
      %v1746 = vrot.slane %v1744, 7
      %v1747 = vshll.u32 %v1718, 16
      %v1749 = vor.u32 %v1746, %v1747
      %v1750 = vrot.slane %v1746, 4
      %v1759 = vsel %vm748, %v1725, %v773
      %1760 = vst [vmem:[#allocation2] sm:$0xff] %v1759
      %v1761 = vld [vmem:[#allocation2 + $0x8] sm:$0x11]
      %v1762 = vsel %vm238, %v1726, %v1761
      %1763 = vst [vmem:[#allocation2 + $0x8] sm:$0x11] %v1762
      %v1764 = vld [vmem:[#allocation2 + $0x10] sm:$0xff]
      %v1765 = vsel %vm748, %v1733, %v1764
      %1766 = vst [vmem:[#allocation2 + $0x10] sm:$0xff] %v1765
      %v1767 = vld [vmem:[#allocation2 + $0x18] sm:$0x11]
      %v1768 = vsel %vm238, %v1734, %v1767
      %1769 = vst [vmem:[#allocation2 + $0x18] sm:$0x11] %v1768
      %v1770 = vld [vmem:[#allocation2 + $0x20] sm:$0xff]
      %v1771 = vsel %vm748, %v1741, %v1770
      %1772 = vst [vmem:[#allocation2 + $0x20] sm:$0xff] %v1771
      %v1773 = vld [vmem:[#allocation2 + $0x28] sm:$0x11]
      %v1774 = vsel %vm238, %v1742, %v1773
      %1775 = vst [vmem:[#allocation2 + $0x28] sm:$0x11] %v1774
      %v1776 = vld [vmem:[#allocation2 + $0x30] sm:$0xff]
      %v1777 = vsel %vm748, %v1749, %v1776
      %1778 = vst [vmem:[#allocation2 + $0x30] sm:$0xff] %v1777
      %v1779 = vld [vmem:[#allocation2 + $0x38] sm:$0x11]
      %v1780 = vsel %vm238, %v1750, %v1779
      %1781 = vst [vmem:[#allocation2 + $0x38] sm:$0x11] %v1780
      %v1782 = vld [vmem:[#allocation2] sm:$0xff]
      %v1783 = vld [vmem:[#allocation2 + $0x10] sm:$0xff]
      %v1784 = vld [vmem:[#allocation2 + $0x20] sm:$0xff]
      %v1785 = vld [vmem:[#allocation2 + $0x30] sm:$0xff]
      %v1786 = vld [vmem:[%s3] sm:$0xf]
      %v1787 = vld [vmem:[%s3 + $0x4] sm:$0xf]
      %v1788 = vld [vmem:[%s3 + $0x8] sm:$0xf]
      %v1789 = vld [vmem:[%s3 + $0xc] sm:$0xf]
      %v1790 = vld [vmem:[%s3 + $0x10] sm:$0xf]
      %v1791 = vld [vmem:[%s3 + $0x14] sm:$0xf]
      %v1792 = vld [vmem:[%s3 + $0x18] sm:$0xf]
      %v1793 = vld [vmem:[%s3 + $0x1c] sm:$0xf]
      %v1794 = vld [vmem:[%s3 + $0x20] sm:$0xf]
      %v1795 = vld [vmem:[%s3 + $0x24] sm:$0xf]
      %v1796 = vld [vmem:[%s3 + $0x28] sm:$0xf]
      %v1797 = vld [vmem:[%s3 + $0x2c] sm:$0xf]
      %v1798 = vld [vmem:[%s3 + $0x30] sm:$0xf]
      %v1799 = vld [vmem:[%s3 + $0x34] sm:$0xf]
      %v1800 = vld [vmem:[%s3 + $0x38] sm:$0xf]
      %v1801 = vld [vmem:[%s3 + $0x3c] sm:$0xf]
      %v1802 = vld [vmem:[%s3 + $0x40] sm:$0xf]
      %v1803 = vld [vmem:[%s3 + $0x44] sm:$0xf]
      %v1804 = vld [vmem:[%s3 + $0x48] sm:$0xf]
      %v1805 = vld [vmem:[%s3 + $0x4c] sm:$0xf]
      %v1806 = vld [vmem:[%s3 + $0x50] sm:$0xf]
      %v1807 = vld [vmem:[%s3 + $0x54] sm:$0xf]
      %v1808 = vld [vmem:[%s3 + $0x58] sm:$0xf]
      %v1809 = vld [vmem:[%s3 + $0x5c] sm:$0xf]
      %v1810 = vld [vmem:[%s3 + $0x60] sm:$0xf]
      %v1811 = vld [vmem:[%s3 + $0x64] sm:$0xf]
      %v1812 = vld [vmem:[%s3 + $0x68] sm:$0xf]
      %v1813 = vld [vmem:[%s3 + $0x6c] sm:$0xf]
      %v1814 = vld [vmem:[%s3 + $0x70] sm:$0xf]
      %v1815 = vld [vmem:[%s3 + $0x74] sm:$0xf]
      %v1816 = vld [vmem:[%s3 + $0x78] sm:$0xf]
      %v1817 = vld [vmem:[%s3 + $0x7c] sm:$0xf]
      %v1818 = vld [vmem:[#allocation2 + $0x8] sm:$0x11]
      %v1819 = vld [vmem:[#allocation2 + $0x18] sm:$0x11]
      %v1820 = vld [vmem:[#allocation2 + $0x28] sm:$0x11]
      %v1821 = vld [vmem:[#allocation2 + $0x38] sm:$0x11]
      %v1823 = vshrl.u32 %v1782, 16
      %v1825 = vrot.slane %v1823, 4
      %v1826 = vshll.u32 %v1782, 16
      %v1828 = vrot.slane %v1826, 5
      %v1829 = vor.u32 %v1825, %v1828
      %v1830 = vrot.slane %v1829, 4
      %v1832 = vshll.u32 %v1818, 16
      %v1834 = vrot.slane %v1832, 5
      %v1835 = vsel %vm282, %v1830, %v1834
      %v1837 = vshrl.u32 %v1783, 16
      %v1839 = vrot.slane %v1837, 4
      %v1840 = vshll.u32 %v1783, 16
      %v1842 = vrot.slane %v1840, 5
      %v1843 = vor.u32 %v1839, %v1842
      %v1844 = vrot.slane %v1843, 4
      %v1846 = vshll.u32 %v1819, 16
      %v1848 = vrot.slane %v1846, 5
      %v1849 = vsel %vm282, %v1844, %v1848
      %v1851 = vshrl.u32 %v1784, 16
      %v1853 = vrot.slane %v1851, 4
      %v1854 = vshll.u32 %v1784, 16
      %v1856 = vrot.slane %v1854, 5
      %v1857 = vor.u32 %v1853, %v1856
      %v1858 = vrot.slane %v1857, 4
      %v1860 = vshll.u32 %v1820, 16
      %v1862 = vrot.slane %v1860, 5
      %v1863 = vsel %vm282, %v1858, %v1862
      %v1865 = vshrl.u32 %v1785, 16
      %v1867 = vrot.slane %v1865, 4
      %v1868 = vshll.u32 %v1785, 16
      %v1870 = vrot.slane %v1868, 5
      %v1871 = vor.u32 %v1867, %v1870
      %v1872 = vrot.slane %v1871, 4
      %v1874 = vshll.u32 %v1821, 16
      %v1876 = vrot.slane %v1874, 5
      %v1877 = vsel %vm282, %v1872, %v1876
      %s1878 = scalar_lea.vmem %s3, 128
      %v1879 = vld [vmem:[%s1878] sm:$0xf]
      %v1880 = vld [vmem:[%s1878 + $0x4] sm:$0xf]
      %v1881 = vld [vmem:[%s1878 + $0x8] sm:$0xf]
      %v1882 = vld [vmem:[%s1878 + $0xc] sm:$0xf]
      %v1883 = vld [vmem:[%s1878 + $0x10] sm:$0xf]
      %v1884 = vld [vmem:[%s1878 + $0x14] sm:$0xf]
      %v1885 = vld [vmem:[%s1878 + $0x18] sm:$0xf]
      %v1886 = vld [vmem:[%s1878 + $0x1c] sm:$0xf]
      %v1887 = vld [vmem:[%s1878 + $0x20] sm:$0xf]
      %v1888 = vld [vmem:[%s1878 + $0x24] sm:$0xf]
      %v1889 = vld [vmem:[%s1878 + $0x28] sm:$0xf]
      %v1890 = vld [vmem:[%s1878 + $0x2c] sm:$0xf]
      %v1891 = vld [vmem:[%s1878 + $0x30] sm:$0xf]
      %v1892 = vld [vmem:[%s1878 + $0x34] sm:$0xf]
      %v1893 = vld [vmem:[%s1878 + $0x38] sm:$0xf]
      %v1894 = vld [vmem:[%s1878 + $0x3c] sm:$0xf]
      %v1895 = vld [vmem:[%s1878 + $0x40] sm:$0xf]
      %v1896 = vld [vmem:[%s1878 + $0x44] sm:$0xf]
      %v1897 = vld [vmem:[%s1878 + $0x48] sm:$0xf]
      %v1898 = vld [vmem:[%s1878 + $0x4c] sm:$0xf]
      %v1899 = vld [vmem:[%s1878 + $0x50] sm:$0xf]
      %v1900 = vld [vmem:[%s1878 + $0x54] sm:$0xf]
      %v1901 = vld [vmem:[%s1878 + $0x58] sm:$0xf]
      %v1902 = vld [vmem:[%s1878 + $0x5c] sm:$0xf]
      %v1903 = vld [vmem:[%s1878 + $0x60] sm:$0xf]
      %v1904 = vld [vmem:[%s1878 + $0x64] sm:$0xf]
      %v1905 = vld [vmem:[%s1878 + $0x68] sm:$0xf]
      %v1906 = vld [vmem:[%s1878 + $0x6c] sm:$0xf]
      %v1907 = vld [vmem:[%s1878 + $0x70] sm:$0xf]
      %v1908 = vld [vmem:[%s1878 + $0x74] sm:$0xf]
      %v1909 = vld [vmem:[%s1878 + $0x78] sm:$0xf]
      %v1910 = vld [vmem:[%s1878 + $0x7c] sm:$0xf]
      %v1911 = vunpack.c.l.b16 %v1835
      %v1912 = vunpack.c.h.b16 %v1835
      %v1913 = vunpack.c.l.b16 %v1849
      %v1914 = vunpack.c.h.b16 %v1849
      %v1915 = vunpack.c.l.b16 %v1863
      %v1916 = vunpack.c.h.b16 %v1863
      %v1917 = vunpack.c.l.b16 %v1877
      %v1918 = vunpack.c.h.b16 %v1877
      %v1919 = vpack.c.b16 %v1913, %v1911
      %v1920 = vpack.c.b16 %v1914, %v1912
      %v1921 = vpack.c.b16 %v1917, %v1915
      %v1922 = vpack.c.b16 %v1918, %v1916
      %v1959 = vunpack.c.l.b16 %v1879
      %v1960 = vunpack.c.l.b16 %v1880
      %v1961 = vunpack.c.l.b16 %v1881
      %v1962 = vunpack.c.l.b16 %v1882
      %v1963 = vunpack.c.l.b16 %v1883
      %v1964 = vunpack.c.l.b16 %v1884
      %v1965 = vunpack.c.l.b16 %v1885
      %v1966 = vunpack.c.l.b16 %v1886
      %v1967 = vunpack.c.l.b16 %v1887
      %v1968 = vunpack.c.l.b16 %v1888
      %v1969 = vunpack.c.l.b16 %v1889
      %v1970 = vunpack.c.l.b16 %v1890
      %v1971 = vunpack.c.l.b16 %v1891
      %v1972 = vunpack.c.l.b16 %v1892
      %v1973 = vunpack.c.l.b16 %v1893
      %v1974 = vunpack.c.l.b16 %v1894
      %v1975 = vunpack.c.l.b16 %v1895
      %v1976 = vunpack.c.l.b16 %v1896
      %v1977 = vunpack.c.l.b16 %v1897
      %v1978 = vunpack.c.l.b16 %v1898
      %v1979 = vunpack.c.l.b16 %v1899
      %v1980 = vunpack.c.l.b16 %v1900
      %v1981 = vunpack.c.l.b16 %v1901
      %v1982 = vunpack.c.l.b16 %v1902
      %v1983 = vunpack.c.l.b16 %v1903
      %v1984 = vunpack.c.l.b16 %v1904
      %v1985 = vunpack.c.l.b16 %v1905
      %v1986 = vunpack.c.l.b16 %v1906
      %v1987 = vunpack.c.l.b16 %v1907
      %v1988 = vunpack.c.l.b16 %v1908
      %v1989 = vunpack.c.l.b16 %v1909
      %v1990 = vunpack.c.l.b16 %v1910
      %v1991 = vpack.c.b16 %v1960, %v1959
      %v1992 = vpack.c.b16 %v1962, %v1961
      %v1993 = vpack.c.b16 %v1964, %v1963
      %v1994 = vpack.c.b16 %v1966, %v1965
      %v1995 = vpack.c.b16 %v1968, %v1967
      %v1996 = vpack.c.b16 %v1970, %v1969
      %v1997 = vpack.c.b16 %v1972, %v1971
      %v1998 = vpack.c.b16 %v1974, %v1973
      %v1999 = vpack.c.b16 %v1976, %v1975
      %v2000 = vpack.c.b16 %v1978, %v1977
      %v2001 = vpack.c.b16 %v1980, %v1979
      %v2002 = vpack.c.b16 %v1982, %v1981
      %v2003 = vpack.c.b16 %v1984, %v1983
      %v2004 = vpack.c.b16 %v1986, %v1985
      %v2005 = vpack.c.b16 %v1988, %v1987
      %v2006 = vpack.c.b16 %v1990, %v1989
      %2023 = vmatprep.subr.bf16.mxu0 0
      %2024 = vmatpush1.bf16.msra.mxu0 %v1991
      %2025 = vmatprep.subr.bf16.mxu0 0
      %2026 = vmatpush1.bf16.msra.mxu0 %v1992
      %2027 = vmatprep.subr.bf16.mxu0 0
      %2028 = vmatpush1.bf16.msra.mxu0 %v1993
      %2029 = vmatprep.subr.bf16.mxu0 0
      %2030 = vmatpush1.bf16.msra.mxu0 %v1994
      %2031 = vmatprep.subr.bf16.mxu0 0
      %2032 = vmatpush1.bf16.msra.mxu0 %v1995
      %2033 = vmatprep.subr.bf16.mxu0 0
      %2034 = vmatpush1.bf16.msra.mxu0 %v1996
      %2035 = vmatprep.subr.bf16.mxu0 0
      %2036 = vmatpush1.bf16.msra.mxu0 %v1997
      %2037 = vmatprep.subr.bf16.mxu0 0
      %2038 = vmatpush1.bf16.msra.mxu0 %v1998
      %2039 = vmatprep.subr.bf16.mxu0 0
      %2040 = vmatpush1.bf16.msra.mxu0 %v1999
      %2041 = vmatprep.subr.bf16.mxu0 0
      %2042 = vmatpush1.bf16.msra.mxu0 %v2000
      %2043 = vmatprep.subr.bf16.mxu0 0
      %2044 = vmatpush1.bf16.msra.mxu0 %v2001
      %2045 = vmatprep.subr.bf16.mxu0 0
      %2046 = vmatpush1.bf16.msra.mxu0 %v2002
      %2047 = vmatprep.subr.bf16.mxu0 0
      %2048 = vmatpush1.bf16.msra.mxu0 %v2003
      %2049 = vmatprep.subr.bf16.mxu0 0
      %2050 = vmatpush1.bf16.msra.mxu0 %v2004
      %2051 = vmatprep.subr.bf16.mxu0 0
      %2052 = vmatpush1.bf16.msra.mxu0 %v2005
      %2053 = vmatprep.subr.bf16.mxu0 0
      %2054 = vmatpush1.bf16.msra.mxu0 %v2006
      %2055 = vmatprep.mubr.bf16.mxu0 %v1920
      %2056 = vmatmul.mubr.bf16.gmra.mrb[0].mxu0 %v1919
      %v2057 = vpop.f32.mrb[0].mxu0
      %v2058 = vadd.f32 0.0, %v2057
      %v2059 = vpop.f32.mrb[0].mxu0
      %v2060 = vpop.f32.mrb[0].mxu0
      %v2061 = vadd.f32 0.0, %v2060
      %v2062 = vpop.f32.mrb[0].mxu0
      %2063 = vmatprep.mubr.bf16.mxu0 %v1922
      %2064 = vmatmul.mubr.bf16.gmra.mrb[0].mxu0 %v1921
      %v2065 = vpop.f32.mrb[0].mxu0
      %v2066 = vadd.f32 0.0, %v2065
      %v2067 = vpop.f32.mrb[0].mxu0
      %v2068 = vpop.f32.mrb[0].mxu0
      %v2069 = vadd.f32 0.0, %v2068
      %v2070 = vpop.f32.mrb[0].mxu0
      %2071 = vdwg.mxu0
      %v2076 = vunpack.c.l.b16 %v1782
      %v2077 = vunpack.c.h.b16 %v1782
      %v2078 = vunpack.c.l.b16 %v1783
      %v2079 = vunpack.c.h.b16 %v1783
      %v2080 = vunpack.c.l.b16 %v1784
      %v2081 = vunpack.c.h.b16 %v1784
      %v2082 = vunpack.c.l.b16 %v1785
      %v2083 = vunpack.c.h.b16 %v1785
      %v2084 = vpack.c.b16 %v2078, %v2076
      %v2085 = vpack.c.b16 %v2079, %v2077
      %v2086 = vpack.c.b16 %v2082, %v2080
      %v2087 = vpack.c.b16 %v2083, %v2081
      %v2124 = vunpack.c.l.b16 %v1786
      %v2125 = vunpack.c.l.b16 %v1787
      %v2126 = vunpack.c.l.b16 %v1788
      %v2127 = vunpack.c.l.b16 %v1789
      %v2128 = vunpack.c.l.b16 %v1790
      %v2129 = vunpack.c.l.b16 %v1791
      %v2130 = vunpack.c.l.b16 %v1792
      %v2131 = vunpack.c.l.b16 %v1793
      %v2132 = vunpack.c.l.b16 %v1794
      %v2133 = vunpack.c.l.b16 %v1795
      %v2134 = vunpack.c.l.b16 %v1796
      %v2135 = vunpack.c.l.b16 %v1797
      %v2136 = vunpack.c.l.b16 %v1798
      %v2137 = vunpack.c.l.b16 %v1799
      %v2138 = vunpack.c.l.b16 %v1800
      %v2139 = vunpack.c.l.b16 %v1801
      %v2140 = vunpack.c.l.b16 %v1802
      %v2141 = vunpack.c.l.b16 %v1803
      %v2142 = vunpack.c.l.b16 %v1804
      %v2143 = vunpack.c.l.b16 %v1805
      %v2144 = vunpack.c.l.b16 %v1806
      %v2145 = vunpack.c.l.b16 %v1807
      %v2146 = vunpack.c.l.b16 %v1808
      %v2147 = vunpack.c.l.b16 %v1809
      %v2148 = vunpack.c.l.b16 %v1810
      %v2149 = vunpack.c.l.b16 %v1811
      %v2150 = vunpack.c.l.b16 %v1812
      %v2151 = vunpack.c.l.b16 %v1813
      %v2152 = vunpack.c.l.b16 %v1814
      %v2153 = vunpack.c.l.b16 %v1815
      %v2154 = vunpack.c.l.b16 %v1816
      %v2155 = vunpack.c.l.b16 %v1817
      %v2156 = vpack.c.b16 %v2125, %v2124
      %v2157 = vpack.c.b16 %v2127, %v2126
      %v2158 = vpack.c.b16 %v2129, %v2128
      %v2159 = vpack.c.b16 %v2131, %v2130
      %v2160 = vpack.c.b16 %v2133, %v2132
      %v2161 = vpack.c.b16 %v2135, %v2134
      %v2162 = vpack.c.b16 %v2137, %v2136
      %v2163 = vpack.c.b16 %v2139, %v2138
      %v2164 = vpack.c.b16 %v2141, %v2140
      %v2165 = vpack.c.b16 %v2143, %v2142
      %v2166 = vpack.c.b16 %v2145, %v2144
      %v2167 = vpack.c.b16 %v2147, %v2146
      %v2168 = vpack.c.b16 %v2149, %v2148
      %v2169 = vpack.c.b16 %v2151, %v2150
      %v2170 = vpack.c.b16 %v2153, %v2152
      %v2171 = vpack.c.b16 %v2155, %v2154
      %2188 = vmatprep.subr.bf16.mxu0 0
      %2189 = vmatpush1.bf16.msra.mxu0 %v2156
      %2190 = vmatprep.subr.bf16.mxu0 0
      %2191 = vmatpush1.bf16.msra.mxu0 %v2157
      %2192 = vmatprep.subr.bf16.mxu0 0
      %2193 = vmatpush1.bf16.msra.mxu0 %v2158
      %2194 = vmatprep.subr.bf16.mxu0 0
      %2195 = vmatpush1.bf16.msra.mxu0 %v2159
      %2196 = vmatprep.subr.bf16.mxu0 0
      %2197 = vmatpush1.bf16.msra.mxu0 %v2160
      %2198 = vmatprep.subr.bf16.mxu0 0
      %2199 = vmatpush1.bf16.msra.mxu0 %v2161
      %2200 = vmatprep.subr.bf16.mxu0 0
      %2201 = vmatpush1.bf16.msra.mxu0 %v2162
      %2202 = vmatprep.subr.bf16.mxu0 0
      %2203 = vmatpush1.bf16.msra.mxu0 %v2163
      %2204 = vmatprep.subr.bf16.mxu0 0
      %2205 = vmatpush1.bf16.msra.mxu0 %v2164
      %2206 = vmatprep.subr.bf16.mxu0 0
      %2207 = vmatpush1.bf16.msra.mxu0 %v2165
      %2208 = vmatprep.subr.bf16.mxu0 0
      %2209 = vmatpush1.bf16.msra.mxu0 %v2166
      %2210 = vmatprep.subr.bf16.mxu0 0
      %2211 = vmatpush1.bf16.msra.mxu0 %v2167
      %2212 = vmatprep.subr.bf16.mxu0 0
      %2213 = vmatpush1.bf16.msra.mxu0 %v2168
      %2214 = vmatprep.subr.bf16.mxu0 0
      %2215 = vmatpush1.bf16.msra.mxu0 %v2169
      %2216 = vmatprep.subr.bf16.mxu0 0
      %2217 = vmatpush1.bf16.msra.mxu0 %v2170
      %2218 = vmatprep.subr.bf16.mxu0 0
      %2219 = vmatpush1.bf16.msra.mxu0 %v2171
      %2220 = vmatprep.mubr.bf16.mxu0 %v2085
      %2221 = vmatmul.mubr.bf16.gmra.mrb[0].mxu0 %v2084
      %v2222 = vpop.f32.mrb[0].mxu0
      %v2223 = vadd.f32 %v2058, %v2222
      %v2224 = vpop.f32.mrb[0].mxu0
      %v2225 = vpop.f32.mrb[0].mxu0
      %v2226 = vadd.f32 %v2061, %v2225
      %v2227 = vpop.f32.mrb[0].mxu0
      %2228 = vmatprep.mubr.bf16.mxu0 %v2087
      %2229 = vmatmul.mubr.bf16.gmra.mrb[0].mxu0 %v2086
      %v2230 = vpop.f32.mrb[0].mxu0
      %v2231 = vadd.f32 %v2066, %v2230
      %v2232 = vpop.f32.mrb[0].mxu0
      %v2233 = vpop.f32.mrb[0].mxu0
      %v2234 = vadd.f32 %v2069, %v2233
      %v2235 = vpop.f32.mrb[0].mxu0
      %2236 = vdwg.mxu0
      %v2237 = vld [vmem:[#allocation2] sm:$0xee]
      %v2238 = vld [vmem:[#allocation2 + $0x10] sm:$0xee]
      %v2239 = vld [vmem:[#allocation2 + $0x20] sm:$0xee]
      %v2240 = vld [vmem:[#allocation2 + $0x30] sm:$0xee]
      %v2249 = vrot.slane %v2237, 5
      %v2250 = vrot.slane %v2249, 4
      %v2251 = vrot.slane %v1818, 5
      %v2252 = vsel %vm533, %v2250, %v2251
      %v2253 = vrot.slane %v2238, 5
      %v2254 = vrot.slane %v2253, 4
      %v2255 = vrot.slane %v1819, 5
      %v2256 = vsel %vm533, %v2254, %v2255
      %v2257 = vrot.slane %v2239, 5
      %v2258 = vrot.slane %v2257, 4
      %v2259 = vrot.slane %v1820, 5
      %v2260 = vsel %vm533, %v2258, %v2259
      %v2261 = vrot.slane %v2240, 5
      %v2262 = vrot.slane %v2261, 4
      %v2263 = vrot.slane %v1821, 5
      %v2264 = vsel %vm533, %v2262, %v2263
      %s2265 = scalar_lea.vmem %s3, 256
      %v2266 = vld [vmem:[%s2265] sm:$0xf]
      %v2267 = vld [vmem:[%s2265 + $0x4] sm:$0xf]
      %v2268 = vld [vmem:[%s2265 + $0x8] sm:$0xf]
      %v2269 = vld [vmem:[%s2265 + $0xc] sm:$0xf]
      %v2270 = vld [vmem:[%s2265 + $0x10] sm:$0xf]
      %v2271 = vld [vmem:[%s2265 + $0x14] sm:$0xf]
      %v2272 = vld [vmem:[%s2265 + $0x18] sm:$0xf]
      %v2273 = vld [vmem:[%s2265 + $0x1c] sm:$0xf]
      %v2274 = vld [vmem:[%s2265 + $0x20] sm:$0xf]
      %v2275 = vld [vmem:[%s2265 + $0x24] sm:$0xf]
      %v2276 = vld [vmem:[%s2265 + $0x28] sm:$0xf]
      %v2277 = vld [vmem:[%s2265 + $0x2c] sm:$0xf]
      %v2278 = vld [vmem:[%s2265 + $0x30] sm:$0xf]
      %v2279 = vld [vmem:[%s2265 + $0x34] sm:$0xf]
      %v2280 = vld [vmem:[%s2265 + $0x38] sm:$0xf]
      %v2281 = vld [vmem:[%s2265 + $0x3c] sm:$0xf]
      %v2282 = vld [vmem:[%s2265 + $0x40] sm:$0xf]
      %v2283 = vld [vmem:[%s2265 + $0x44] sm:$0xf]
      %v2284 = vld [vmem:[%s2265 + $0x48] sm:$0xf]
      %v2285 = vld [vmem:[%s2265 + $0x4c] sm:$0xf]
      %v2286 = vld [vmem:[%s2265 + $0x50] sm:$0xf]
      %v2287 = vld [vmem:[%s2265 + $0x54] sm:$0xf]
      %v2288 = vld [vmem:[%s2265 + $0x58] sm:$0xf]
      %v2289 = vld [vmem:[%s2265 + $0x5c] sm:$0xf]
      %v2290 = vld [vmem:[%s2265 + $0x60] sm:$0xf]
      %v2291 = vld [vmem:[%s2265 + $0x64] sm:$0xf]
      %v2292 = vld [vmem:[%s2265 + $0x68] sm:$0xf]
      %v2293 = vld [vmem:[%s2265 + $0x6c] sm:$0xf]
      %v2294 = vld [vmem:[%s2265 + $0x70] sm:$0xf]
      %v2295 = vld [vmem:[%s2265 + $0x74] sm:$0xf]
      %v2296 = vld [vmem:[%s2265 + $0x78] sm:$0xf]
      %v2297 = vld [vmem:[%s2265 + $0x7c] sm:$0xf]
      %v2298 = vunpack.c.l.b16 %v2252
      %v2299 = vunpack.c.h.b16 %v2252
      %v2300 = vunpack.c.l.b16 %v2256
      %v2301 = vunpack.c.h.b16 %v2256
      %v2302 = vunpack.c.l.b16 %v2260
      %v2303 = vunpack.c.h.b16 %v2260
      %v2304 = vunpack.c.l.b16 %v2264
      %v2305 = vunpack.c.h.b16 %v2264
      %v2306 = vpack.c.b16 %v2300, %v2298
      %v2307 = vpack.c.b16 %v2301, %v2299
      %v2308 = vpack.c.b16 %v2304, %v2302
      %v2309 = vpack.c.b16 %v2305, %v2303
      %v2346 = vunpack.c.l.b16 %v2266
      %v2347 = vunpack.c.l.b16 %v2267
      %v2348 = vunpack.c.l.b16 %v2268
      %v2349 = vunpack.c.l.b16 %v2269
      %v2350 = vunpack.c.l.b16 %v2270
      %v2351 = vunpack.c.l.b16 %v2271
      %v2352 = vunpack.c.l.b16 %v2272
      %v2353 = vunpack.c.l.b16 %v2273
      %v2354 = vunpack.c.l.b16 %v2274
      %v2355 = vunpack.c.l.b16 %v2275
      %v2356 = vunpack.c.l.b16 %v2276
      %v2357 = vunpack.c.l.b16 %v2277
      %v2358 = vunpack.c.l.b16 %v2278
      %v2359 = vunpack.c.l.b16 %v2279
      %v2360 = vunpack.c.l.b16 %v2280
      %v2361 = vunpack.c.l.b16 %v2281
      %v2362 = vunpack.c.l.b16 %v2282
      %v2363 = vunpack.c.l.b16 %v2283
      %v2364 = vunpack.c.l.b16 %v2284
      %v2365 = vunpack.c.l.b16 %v2285
      %v2366 = vunpack.c.l.b16 %v2286
      %v2367 = vunpack.c.l.b16 %v2287
      %v2368 = vunpack.c.l.b16 %v2288
      %v2369 = vunpack.c.l.b16 %v2289
      %v2370 = vunpack.c.l.b16 %v2290
      %v2371 = vunpack.c.l.b16 %v2291
      %v2372 = vunpack.c.l.b16 %v2292
      %v2373 = vunpack.c.l.b16 %v2293
      %v2374 = vunpack.c.l.b16 %v2294
      %v2375 = vunpack.c.l.b16 %v2295
      %v2376 = vunpack.c.l.b16 %v2296
      %v2377 = vunpack.c.l.b16 %v2297
      %v2378 = vpack.c.b16 %v2347, %v2346
      %v2379 = vpack.c.b16 %v2349, %v2348
      %v2380 = vpack.c.b16 %v2351, %v2350
      %v2381 = vpack.c.b16 %v2353, %v2352
      %v2382 = vpack.c.b16 %v2355, %v2354
      %v2383 = vpack.c.b16 %v2357, %v2356
      %v2384 = vpack.c.b16 %v2359, %v2358
      %v2385 = vpack.c.b16 %v2361, %v2360
      %v2386 = vpack.c.b16 %v2363, %v2362
      %v2387 = vpack.c.b16 %v2365, %v2364
      %v2388 = vpack.c.b16 %v2367, %v2366
      %v2389 = vpack.c.b16 %v2369, %v2368
      %v2390 = vpack.c.b16 %v2371, %v2370
      %v2391 = vpack.c.b16 %v2373, %v2372
      %v2392 = vpack.c.b16 %v2375, %v2374
      %v2393 = vpack.c.b16 %v2377, %v2376
      %2410 = vmatprep.subr.bf16.mxu0 0
      %2411 = vmatpush1.bf16.msra.mxu0 %v2378
      %2412 = vmatprep.subr.bf16.mxu0 0
      %2413 = vmatpush1.bf16.msra.mxu0 %v2379
      %2414 = vmatprep.subr.bf16.mxu0 0
      %2415 = vmatpush1.bf16.msra.mxu0 %v2380
      %2416 = vmatprep.subr.bf16.mxu0 0
      %2417 = vmatpush1.bf16.msra.mxu0 %v2381
      %2418 = vmatprep.subr.bf16.mxu0 0
      %2419 = vmatpush1.bf16.msra.mxu0 %v2382
      %2420 = vmatprep.subr.bf16.mxu0 0
      %2421 = vmatpush1.bf16.msra.mxu0 %v2383
      %2422 = vmatprep.subr.bf16.mxu0 0
      %2423 = vmatpush1.bf16.msra.mxu0 %v2384
      %2424 = vmatprep.subr.bf16.mxu0 0
      %2425 = vmatpush1.bf16.msra.mxu0 %v2385
      %2426 = vmatprep.subr.bf16.mxu0 0
      %2427 = vmatpush1.bf16.msra.mxu0 %v2386
      %2428 = vmatprep.subr.bf16.mxu0 0
      %2429 = vmatpush1.bf16.msra.mxu0 %v2387
      %2430 = vmatprep.subr.bf16.mxu0 0
      %2431 = vmatpush1.bf16.msra.mxu0 %v2388
      %2432 = vmatprep.subr.bf16.mxu0 0
      %2433 = vmatpush1.bf16.msra.mxu0 %v2389
      %2434 = vmatprep.subr.bf16.mxu0 0
      %2435 = vmatpush1.bf16.msra.mxu0 %v2390
      %2436 = vmatprep.subr.bf16.mxu0 0
      %2437 = vmatpush1.bf16.msra.mxu0 %v2391
      %2438 = vmatprep.subr.bf16.mxu0 0
      %2439 = vmatpush1.bf16.msra.mxu0 %v2392
      %2440 = vmatprep.subr.bf16.mxu0 0
      %2441 = vmatpush1.bf16.msra.mxu0 %v2393
      %2442 = vmatprep.mubr.bf16.mxu0 %v2307
      %2443 = vmatmul.mubr.bf16.gmra.mrb[0].mxu0 %v2306
      %v2444 = vpop.f32.mrb[0].mxu0
      %v2445 = vadd.f32 0.0, %v2444
      %v2446 = vpop.f32.mrb[0].mxu0
      %v2447 = vpop.f32.mrb[0].mxu0
      %v2448 = vadd.f32 0.0, %v2447
      %v2449 = vpop.f32.mrb[0].mxu0
      %2450 = vmatprep.mubr.bf16.mxu0 %v2309
      %2451 = vmatmul.mubr.bf16.gmra.mrb[0].mxu0 %v2308
      %v2452 = vpop.f32.mrb[0].mxu0
      %v2453 = vadd.f32 0.0, %v2452
      %v2454 = vpop.f32.mrb[0].mxu0
      %v2455 = vpop.f32.mrb[0].mxu0
      %v2456 = vadd.f32 0.0, %v2455
      %v2457 = vpop.f32.mrb[0].mxu0
      %2458 = vdwg.mxu0
      %v2459 = vadd.f32 %v2223, %v2445
      %v2460 = vadd.f32 %v2226, %v2448
      %v2461 = vadd.f32 %v2231, %v2453
      %v2462 = vadd.f32 %v2234, %v2456
      %v2463 = vld [vmem:[%s4 + $0x2] ss:$0 sm:$0xff]
      %v2464 = vadd.f32 %v2459, %v2463
      %v2465 = vadd.f32 %v2460, %v2463
      %v2466 = vadd.f32 %v2461, %v2463
      %v2467 = vadd.f32 %v2462, %v2463
      %v2468 = vpack.c.bf16 %v2465, %v2464
      %v2469 = vpack.c.bf16 %v2467, %v2466
      %v2472 = vunpack.c.l.b16 %v2468
      %v2473 = vunpack.c.h.b16 %v2468
      %v2474 = vunpack.c.l.b16 %v2469
      %v2475 = vunpack.c.h.b16 %v2469
      %v2476 = vpack.c.b16 %v2472, %v2472
      %v2477 = vpack.c.b16 %v2473, %v2473
      %v2478 = vpack.c.b16 %v2474, %v2474
      %v2479 = vpack.c.b16 %v2475, %v2475
      %2484 = vst [vmem:[%s229] sm:$0xf] %v2476
      %2485 = vst [vmem:[%s229 + $0x4] sm:$0xf] %v2477
      %2486 = vst [vmem:[%s229 + $0x8] sm:$0xf] %v2478
      %2487 = vst [vmem:[%s229 + $0xc] sm:$0xf] %v2479
      %s2488 = smul.u32 4, %s16
      %p2489 = scmp.lt.s32.totalorder %s2488, 7
      %s2490 = scalar_select %p2489, %s2488, 7
      %s2491 = smul.addr %s2490, 4
      %s2492 = scalar_lea.vmem %s5, %s2491
      // Predicated region
      $region41: #{hier_rcnn_forward.1} parent=39 // pred_check
        %p2493 = pneg %p144
      $region42: #{hier_rcnn_forward.1} parent=39 // pred_check_branch
        %2495 = sbr.rel (%p2493) target = $region44
      $region43: #{hier_rcnn_forward.1} parent=39 // pred_region
        %s2496 = smul.u32 4, %s16
      $region44: #{hier_rcnn_forward.1} parent=39 // pred_fallthru
        _
    $region40: #{hier_rcnn_forward.1} parent=5 // pred_fallthru
      _
    %p2497 = scmp.le.s32.totalorder 2, %s11
    // Predicated region
    $region45: #{hier_rcnn_forward.1} parent=5 // pred_check
      %p2498 = pneg %p2497
    $region46: #{hier_rcnn_forward.1} parent=5 // pred_check_branch
      %2500 = sbr.rel (%p2498) target = $region48
    $region47: #{hier_rcnn_forward.1} parent=5 // pred_region
      %s2501 = ssub.s32 %s11, 2
      // Predicated region
      $region49: #{hier_rcnn_forward.1} parent=47 // pred_check
        %p2502 = pneg %p150
      $region50: #{hier_rcnn_forward.1} parent=47 // pred_check_branch
        %2504 = sbr.rel (%p2502) target = $region52
      $region51: #{hier_rcnn_forward.1} parent=47 // pred_region
        %s2505 = smul.u32 4, %s17
        %p2506 = scmp.lt.s32.totalorder %s2505, 7
        %s2507 = scalar_select %p2506, %s2505, 7
        %s2508 = smul.addr %s2507, 4
        %s2509 = scalar_lea.vmem %s5, %s2508
      $region52: #{hier_rcnn_forward.1} parent=47 // pred_fallthru
        _
    $region48: #{hier_rcnn_forward.1} parent=5 // pred_fallthru
      _
  $region6: #{hier_rcnn_forward.1} parent=0 // loop_footer
    %s15 = sadd.s32 1, %s11
  $region7: #{hier_rcnn_forward.1} parent=0 // loop_footer_branch
    %10 = sbr.rel target = $region3
  $region8: #{hier_rcnn_forward.1} parent=0 // loop_exit
    _

</llo_original>
